<compile_context>
chip_gen: v7x
topology: tpu7x:2x2x1
jax: 0.10.0
libtpu: 0.0.40
codegen_flags: <defaults>
</compile_context>

<pallas_src>
import functools

import jax
import jax.numpy as jnp
from jax.experimental import pallas as pl
from jax.experimental.pallas import tpu as pltpu

L0 = 8  # input sequence length, chosen so 9 * 2 == 18 matches nn.Linear(18, 7)


# --------------------------------------------------------------------------
# Kernel
# --------------------------------------------------------------------------
def _cnn1d_kernel(x_ref, w1k_ref, w1b_ref, c1_ref, w2_ref, c2_ref,
                  w3_ref, c3_ref, wf_ref, bf_ref, out_ref):
    f32 = jnp.float32
    Bt = x_ref.shape[-1]
    C1 = 80

    # Tiny folded weights, loaded once per grid step.
    w1k = w1k_ref[...]                      # (81, 160) = [tap_a | tap_b] along K
    w1b = w1b_ref[...]                      # (81, 80)   tap_b only (left-pad pos.)
    w2a, w2b = w2_ref[0], w2_ref[1]         # (27, 81)
    w3a, w3b = w3_ref[0], w3_ref[1]         # (9, 27)
    wfa, wfb = wf_ref[0], wf_ref[1]         # (7, 9)
    cdt = w1k.dtype

    # Hoist lane-broadcasts of the per-channel shifts out of the unrolled
    # loops (JAX does not CSE broadcast_in_dim).
    c1b = jnp.broadcast_to(c1_ref[...], (81, Bt))
    c2b = jnp.broadcast_to(c2_ref[...], (27, Bt))
    c3b = jnp.broadcast_to(c3_ref[...], (9, Bt))
    bfb = jnp.broadcast_to(bf_ref[...], (7, Bt))

    def mm(w, a):
        # MXU matmul, f32 accumulation (operands stay in the folded dtype).
        return jnp.dot(w, a, preferred_element_type=f32)

    # ---- conv1: Conv1d(80, 81, k=2, s=1, p=1) + BN + ReLU, fused taps ----
    # Output position o reads input positions (o-1, o); o == 0's left tap is
    # zero padding (dropped); o == 8 is dropped by floor-mode MaxPool1d(2, 2).
    def conv1_pos(o):
        if o == 0:
            acc = mm(w1b, x_ref[pl.ds(0, C1), :])
        else:
            # Contiguous K=160 sublane slice (start is a static multiple of 80).
            acc = mm(w1k, x_ref[pl.ds(C1 * (o - 1), 2 * C1), :])
        return jnp.maximum(acc + c1b, 0.0)

    # MaxPool1d(2, 2) fused into the conv1 loop.
    p1 = []
    for i in range(4):
        pooled = jnp.maximum(conv1_pos(2 * i), conv1_pos(2 * i + 1))
        p1.append(pooled.astype(cdt))                        # 4 x (81, Bt)

    # ---- conv2: Conv1d(81, 27, k=2, s=2, p=1) + BN + ReLU (padded 6 -> 3) ----
    h2 = [jnp.maximum(mm(w2b, p1[0]) + c2b, 0.0),
          jnp.maximum(mm(w2a, p1[1]) + mm(w2b, p1[2]) + c2b, 0.0),
          jnp.maximum(mm(w2a, p1[3]) + c2b, 0.0)]            # 3 x (27, Bt)

    # ---- MaxPool1d(2, 1) ----
    p2 = [jnp.maximum(h2[0], h2[1]).astype(cdt),
          jnp.maximum(h2[1], h2[2]).astype(cdt)]             # 2 x (27, Bt)

    # ---- conv3: Conv1d(27, 9, k=2, s=2, p=1) + BN + ReLU (padded 4 -> 2) ----
    h3 = [jnp.maximum(mm(w3b, p2[0]) + c3b, 0.0).astype(cdt),
          jnp.maximum(mm(w3a, p2[1]) + c3b, 0.0).astype(cdt)]   # 2 x (9, Bt)

    # conv4: ReLU is idempotent after conv3's ReLU.
    # TODO(synk): Dropout(0.5) is implemented as inference-mode identity (no RNG mask).

    # Flatten (.view order: flat[c*2 + l]) + Linear(18, 7) + Sigmoid.
    logit = mm(wfa, h3[0]) + mm(wfb, h3[1]) + bfb            # (7, Bt) lane-dense
    out_ref[...] = jax.nn.sigmoid(logit)


# --------------------------------------------------------------------------
# Wrapper
# --------------------------------------------------------------------------
def _round_up(n, m):
    return ((n + m - 1) // m) * m


def _choose_bt(B, block_b):
    block_b = _round_up(max(block_b, 128), 128)
    bt = min(block_b, _round_up(B, 128))
    # Prefer >= 2 grid steps when possible so software pipelining (and v7x
    # megacore sharding of the "parallel" batch axis) actually engage.
    if bt > 128 and _round_up(B, bt) // bt < 2:
        bt = max(128, _round_up((B + 1) // 2, 128))
    return bt


@functools.partial(jax.jit, static_argnames=("block_b",))
def cnn1d_forward(x, params, *, block_b=512):
    """x: (B, 80, L0) float32, NCL layout (same as the PyTorch module) -> (B, 7).

    block_b: batch tile (lanes) per grid step; sweep {512, 1024, 2048} at
    large B (stay inside scoped VMEM on v7x or raise vmem_limit_bytes)."""
    B = x.shape[0]
    w_dtype = params[0].dtype
    Bt = _choose_bt(B, block_b)
    Bpad = _round_up(B, Bt)

    # Layout plumbing only (fused into this jit): batch -> lanes, (L, C) rows
    # flattened so conv1's two taps are one contiguous K=160 sublane slice.
    xt = jnp.transpose(x, (2, 1, 0)).reshape(L0 * 80, B).astype(w_dtype)
    if Bpad != B:
        xt = jnp.pad(xt, ((0, 0), (0, Bpad - B)))

    def const_map(nd):
        return lambda b, _nd=nd: (0,) * _nd

    in_specs = [pl.BlockSpec((L0 * 80, Bt), lambda b: (0, b))]
    in_specs += [pl.BlockSpec(p.shape, const_map(p.ndim)) for p in params]

    out = pl.pallas_call(
        _cnn1d_kernel,
        out_shape=jax.ShapeDtypeStruct((7, Bpad), jnp.float32),
        grid=(Bpad // Bt,),
        in_specs=in_specs,
        out_specs=pl.BlockSpec((7, Bt), lambda b: (0, b)),
        compiler_params=pltpu.CompilerParams(
            dimension_semantics=("parallel",)),
    )(xt, *params)
    return out[:, :B].T                                      # (B, 7)


# ---------------- parameter setup (deterministic, synthetic) ----------------
def init_params(key):
    keys = jax.random.split(key, 20)

    def nrm(k, shape, scale=1.0):
        return scale * jax.random.normal(k, shape, dtype=jnp.float32)

    raw = {}
    # conv1
    raw["w1"] = nrm(keys[0], (81, 80, 2), (80 * 2) ** -0.5)
    raw["b1"] = nrm(keys[1], (81,), 0.1)
    raw["g1"] = 1.0 + nrm(keys[2], (81,), 0.1)
    raw["be1"] = nrm(keys[3], (81,), 0.1)
    raw["m1"] = nrm(keys[4], (81,), 0.1)
    raw["v1"] = jax.random.uniform(keys[5], (81,), jnp.float32, 0.5, 1.5)
    # conv2
    raw["w2"] = nrm(keys[6], (27, 81, 2), (81 * 2) ** -0.5)
    raw["b2"] = nrm(keys[7], (27,), 0.1)
    raw["g2"] = 1.0 + nrm(keys[8], (27,), 0.1)
    raw["be2"] = nrm(keys[9], (27,), 0.1)
    raw["m2"] = nrm(keys[10], (27,), 0.1)
    raw["v2"] = jax.random.uniform(keys[11], (27,), jnp.float32, 0.5, 1.5)
    # conv3
    raw["w3"] = nrm(keys[12], (9, 27, 2), (27 * 2) ** -0.5)
    raw["b3"] = nrm(keys[13], (9,), 0.1)
    raw["g3"] = 1.0 + nrm(keys[14], (9,), 0.1)
    raw["be3"] = nrm(keys[15], (9,), 0.1)
    raw["m3"] = nrm(keys[16], (9,), 0.1)
    raw["v3"] = jax.random.uniform(keys[17], (9,), jnp.float32, 0.5, 1.5)
    # fc
    raw["wfc"] = nrm(keys[18], (7, 18), 18 ** -0.5)
    raw["bfc"] = nrm(keys[19], (7,), 0.1)
    return raw


def fold_params(raw, eps=1e-5, dtype=jnp.bfloat16):
    """Fold conv bias + eval-mode BatchNorm into the weights (W' = s*W) and a
    per-channel shift c = (b - m)*s + beta.  MXU operands default to bf16
    (multi-pass f32 MXU avoided, DMA bytes halved); shifts stay f32 for the
    VPU add / ReLU path.  conv1's two taps are packed into one (81, 160)
    K-fused matrix; the other layers keep a (2, Cout, Cin) tap stack."""
    def fold(w, b, g, be, m, v):
        s = g / jnp.sqrt(v + eps)
        c = (b - m) * s + be
        ws = w * s[:, None, None]                  # (Cout, Cin, 2)
        return ws, c.reshape(-1, 1).astype(jnp.float32)

    ws1, c1 = fold(raw["w1"], raw["b1"], raw["g1"], raw["be1"], raw["m1"], raw["v1"])
    w1k = jnp.concatenate([ws1[:, :, 0], ws1[:, :, 1]], axis=1).astype(dtype)  # (81,160)
    w1b = ws1[:, :, 1].astype(dtype)                                           # (81,80)

    ws2, c2 = fold(raw["w2"], raw["b2"], raw["g2"], raw["be2"], raw["m2"], raw["v2"])
    w2 = jnp.stack([ws2[:, :, 0], ws2[:, :, 1]], axis=0).astype(dtype)         # (2,27,81)
    ws3, c3 = fold(raw["w3"], raw["b3"], raw["g3"], raw["be3"], raw["m3"], raw["v3"])
    w3 = jnp.stack([ws3[:, :, 0], ws3[:, :, 1]], axis=0).astype(dtype)         # (2,9,27)

    wr = raw["wfc"].reshape(7, 9, 2)   # flat index j = c*2 + l (PyTorch .view order)
    wf = jnp.stack([wr[:, :, 0], wr[:, :, 1]], axis=0).astype(dtype)           # (2,7,9)
    bf = raw["bfc"].reshape(7, 1).astype(jnp.float32)
    return (w1k, w1b, c1, w2, c2, w3, c3, wf, bf)


# ---------------- plain-JAX reference (for verification only) ----------------
_PREC = jax.lax.Precision.HIGHEST


def _conv1d(x, w, b, stride, padding):
    y = jax.lax.conv_general_dilated(
        x, w, window_strides=(stride,), padding=[(padding, padding)],
        dimension_numbers=("NCH", "OIH", "NCH"), precision=_PREC)
    return y + b[None, :, None]


def _bn(x, g, be, m, v, eps=1e-5):
    return (x - m[None, :, None]) / jnp.sqrt(v[None, :, None] + eps) \
        * g[None, :, None] + be[None, :, None]


def _maxpool1d(x, k, s):
    Lo = (x.shape[-1] - k) // s + 1
    cols = [x[:, :, i * s:i * s + k].max(axis=-1, keepdims=True) for i in range(Lo)]
    return jnp.concatenate(cols, axis=-1)


def reference_forward(x, raw):
    o = _conv1d(x, raw["w1"], raw["b1"], 1, 1)
    o = _bn(o, raw["g1"], raw["be1"], raw["m1"], raw["v1"])
    o = jax.nn.relu(o)
    o = _maxpool1d(o, 2, 2)
    o = _conv1d(o, raw["w2"], raw["b2"], 2, 1)
    o = _bn(o, raw["g2"], raw["be2"], raw["m2"], raw["v2"])
    o = jax.nn.relu(o)
    o = _maxpool1d(o, 2, 1)
    o = _conv1d(o, raw["w3"], raw["b3"], 2, 1)
    o = _bn(o, raw["g3"], raw["be3"], raw["m3"], raw["v3"])
    o = jax.nn.relu(o)
    o = jax.nn.relu(o)          # conv4 ReLU; Dropout is identity in eval mode
    flat = o.reshape(x.shape[0], -1)
    logit = jnp.matmul(flat, raw["wfc"].T, precision=_PREC) + raw["bfc"]
    return jax.nn.sigmoid(logit)


if __name__ == "__main__":
    key = jax.random.PRNGKey(0)
    kx, kp = jax.random.split(key)
    x = jax.random.normal(kx, (2, 80, L0), dtype=jnp.float32)   # (B, C=80, L=8)

    raw = init_params(kp)
    params = fold_params(raw)     # bf16 MXU operands by default (f32 accumulation)

    out = jax.block_until_ready(cnn1d_forward(x, params))

    ref = reference_forward(x, raw)
    err = float(jnp.max(jnp.abs(out - ref)))
    # bf16 operand tolerance (f32 path stays < 1e-3; bf16 rounding widens it).
    assert out.shape == (2, 7) and err < 3e-2, f"mismatch vs reference: {err}"
    print("KERNEL_OK")
</pallas_src>

<mosaic_0001>
module attributes {stable_mosaic.version = 11 : i64} {
  func.func @_cnn1d_kernel(%arg0: i32, %arg1: memref<640x128xbf16, #tpu.memory_space<vmem>>, %arg2: memref<81x160xbf16, #tpu.memory_space<vmem>>, %arg3: memref<81x80xbf16, #tpu.memory_space<vmem>>, %arg4: memref<81x1xf32, #tpu.memory_space<vmem>>, %arg5: memref<2x27x81xbf16, #tpu.memory_space<vmem>>, %arg6: memref<27x1xf32, #tpu.memory_space<vmem>>, %arg7: memref<2x9x27xbf16, #tpu.memory_space<vmem>>, %arg8: memref<9x1xf32, #tpu.memory_space<vmem>>, %arg9: memref<2x7x9xbf16, #tpu.memory_space<vmem>>, %arg10: memref<7x1xf32, #tpu.memory_space<vmem>>, %arg11: memref<7x128xf32, #tpu.memory_space<vmem>>) attributes {dimension_semantics = [#tpu.dimension_semantics<parallel>], iteration_bounds = array<i64: 1>, scalar_prefetch = 0 : i64, scratch_operands = 0 : i64, tpu.core_type = #tpu.core_type<tc>, window_params = [{transform_indices = @transform_0, window_bounds = array<i64: 640, 128>}, {pipeline_mode = #tpu.pipeline_mode<synchronous>, transform_indices = @transform_1, window_bounds = array<i64: 81, 160>}, {pipeline_mode = #tpu.pipeline_mode<synchronous>, transform_indices = @transform_2, window_bounds = array<i64: 81, 80>}, {pipeline_mode = #tpu.pipeline_mode<synchronous>, transform_indices = @transform_3, window_bounds = array<i64: 81, 1>}, {pipeline_mode = #tpu.pipeline_mode<synchronous>, transform_indices = @transform_4, window_bounds = array<i64: 2, 27, 81>}, {pipeline_mode = #tpu.pipeline_mode<synchronous>, transform_indices = @transform_5, window_bounds = array<i64: 27, 1>}, {pipeline_mode = #tpu.pipeline_mode<synchronous>, transform_indices = @transform_6, window_bounds = array<i64: 2, 9, 27>}, {pipeline_mode = #tpu.pipeline_mode<synchronous>, transform_indices = @transform_7, window_bounds = array<i64: 9, 1>}, {pipeline_mode = #tpu.pipeline_mode<synchronous>, transform_indices = @transform_8, window_bounds = array<i64: 2, 7, 9>}, {pipeline_mode = #tpu.pipeline_mode<synchronous>, transform_indices = @transform_9, window_bounds = array<i64: 7, 1>}, {transform_indices = @transform_10, window_bounds = array<i64: 7, 128>}]} {
    %c0 = arith.constant 0 : index
    %c0_0 = arith.constant 0 : index
    %0 = vector.load %arg2[%c0, %c0_0] : memref<81x160xbf16, #tpu.memory_space<vmem>>, vector<81x160xbf16>
    %c0_1 = arith.constant 0 : index
    %c0_2 = arith.constant 0 : index
    %1 = vector.load %arg3[%c0_1, %c0_2] : memref<81x80xbf16, #tpu.memory_space<vmem>>, vector<81x80xbf16>
    %c0_3 = arith.constant 0 : index
    %c0_4 = arith.constant 0 : index
    %c0_5 = arith.constant 0 : index
    %2 = vector.load %arg5[%c0_3, %c0_4, %c0_5] : memref<2x27x81xbf16, #tpu.memory_space<vmem>>, vector<1x27x81xbf16>
    %3 = vector.shape_cast %2 : vector<1x27x81xbf16> to vector<27x81xbf16>
    %c1 = arith.constant 1 : index
    %c0_6 = arith.constant 0 : index
    %c0_7 = arith.constant 0 : index
    %4 = vector.load %arg5[%c1, %c0_6, %c0_7] : memref<2x27x81xbf16, #tpu.memory_space<vmem>>, vector<1x27x81xbf16>
    %5 = vector.shape_cast %4 : vector<1x27x81xbf16> to vector<27x81xbf16>
    %c0_8 = arith.constant 0 : index
    %c0_9 = arith.constant 0 : index
    %c0_10 = arith.constant 0 : index
    %6 = vector.load %arg7[%c0_8, %c0_9, %c0_10] : memref<2x9x27xbf16, #tpu.memory_space<vmem>>, vector<1x9x27xbf16>
    %7 = vector.shape_cast %6 : vector<1x9x27xbf16> to vector<9x27xbf16>
    %c1_11 = arith.constant 1 : index
    %c0_12 = arith.constant 0 : index
    %c0_13 = arith.constant 0 : index
    %8 = vector.load %arg7[%c1_11, %c0_12, %c0_13] : memref<2x9x27xbf16, #tpu.memory_space<vmem>>, vector<1x9x27xbf16>
    %9 = vector.shape_cast %8 : vector<1x9x27xbf16> to vector<9x27xbf16>
    %c0_14 = arith.constant 0 : index
    %c0_15 = arith.constant 0 : index
    %c0_16 = arith.constant 0 : index
    %10 = vector.load %arg9[%c0_14, %c0_15, %c0_16] : memref<2x7x9xbf16, #tpu.memory_space<vmem>>, vector<1x7x9xbf16>
    %11 = vector.shape_cast %10 : vector<1x7x9xbf16> to vector<7x9xbf16>
    %c1_17 = arith.constant 1 : index
    %c0_18 = arith.constant 0 : index
    %c0_19 = arith.constant 0 : index
    %12 = vector.load %arg9[%c1_17, %c0_18, %c0_19] : memref<2x7x9xbf16, #tpu.memory_space<vmem>>, vector<1x7x9xbf16>
    %13 = vector.shape_cast %12 : vector<1x7x9xbf16> to vector<7x9xbf16>
    %c0_20 = arith.constant 0 : index
    %c0_21 = arith.constant 0 : index
    %14 = vector.load %arg4[%c0_20, %c0_21] : memref<81x1xf32, #tpu.memory_space<vmem>>, vector<81x1xf32>
    %15 = vector.shape_cast %14 : vector<81x1xf32> to vector<81x1xf32>
    %16 = vector.broadcast %15 : vector<81x1xf32> to vector<81x128xf32>
    %c0_22 = arith.constant 0 : index
    %c0_23 = arith.constant 0 : index
    %17 = vector.load %arg6[%c0_22, %c0_23] : memref<27x1xf32, #tpu.memory_space<vmem>>, vector<27x1xf32>
    %18 = vector.shape_cast %17 : vector<27x1xf32> to vector<27x1xf32>
    %19 = vector.broadcast %18 : vector<27x1xf32> to vector<27x128xf32>
    %c0_24 = arith.constant 0 : index
    %c0_25 = arith.constant 0 : index
    %20 = vector.load %arg8[%c0_24, %c0_25] : memref<9x1xf32, #tpu.memory_space<vmem>>, vector<9x1xf32>
    %21 = vector.shape_cast %20 : vector<9x1xf32> to vector<9x1xf32>
    %22 = vector.broadcast %21 : vector<9x1xf32> to vector<9x128xf32>
    %c0_26 = arith.constant 0 : index
    %c0_27 = arith.constant 0 : index
    %23 = vector.load %arg10[%c0_26, %c0_27] : memref<7x1xf32, #tpu.memory_space<vmem>>, vector<7x1xf32>
    %24 = vector.shape_cast %23 : vector<7x1xf32> to vector<7x1xf32>
    %25 = vector.broadcast %24 : vector<7x1xf32> to vector<7x128xf32>
    %c0_28 = arith.constant 0 : index
    %c0_29 = arith.constant 0 : index
    %26 = vector.load %arg1[%c0_28, %c0_29] : memref<640x128xbf16, #tpu.memory_space<vmem>>, vector<80x128xbf16>
    %cst = arith.constant dense<0.000000e+00> : vector<81x128xf32>
    %27 = tpu.matmul %1, %26, %cst {dimension_numbers = #tpu.dot_dimension_numbers<[1], [0], [0], [1], [0, 0, 1, 1], [], []>} : vector<81x80xbf16>, vector<80x128xbf16>, vector<81x128xf32> -> vector<81x128xf32>
    %28 = arith.addf %27, %16 : vector<81x128xf32>
    %cst_30 = arith.constant 0.000000e+00 : f32
    %29 = vector.broadcast %cst_30 : f32 to vector<81x128xf32>
    %30 = arith.maximumf %28, %29 : vector<81x128xf32>
    %c0_31 = arith.constant 0 : index
    %c0_32 = arith.constant 0 : index
    %31 = vector.load %arg1[%c0_31, %c0_32] : memref<640x128xbf16, #tpu.memory_space<vmem>>, vector<160x128xbf16>
    %cst_33 = arith.constant dense<0.000000e+00> : vector<81x128xf32>
    %32 = tpu.matmul %0, %31, %cst_33 {dimension_numbers = #tpu.dot_dimension_numbers<[1], [0], [0], [1], [0, 0, 1, 1], [], []>} : vector<81x160xbf16>, vector<160x128xbf16>, vector<81x128xf32> -> vector<81x128xf32>
    %33 = arith.addf %32, %16 : vector<81x128xf32>
    %cst_34 = arith.constant 0.000000e+00 : f32
    %34 = vector.broadcast %cst_34 : f32 to vector<81x128xf32>
    %35 = arith.maximumf %33, %34 : vector<81x128xf32>
    %36 = arith.maximumf %30, %35 : vector<81x128xf32>
    %37 = arith.truncf %36 : vector<81x128xf32> to vector<81x128xbf16>
    %c80 = arith.constant 80 : index
    %c0_35 = arith.constant 0 : index
    %38 = vector.load %arg1[%c80, %c0_35] : memref<640x128xbf16, #tpu.memory_space<vmem>>, vector<160x128xbf16>
    %cst_36 = arith.constant dense<0.000000e+00> : vector<81x128xf32>
    %39 = tpu.matmul %0, %38, %cst_36 {dimension_numbers = #tpu.dot_dimension_numbers<[1], [0], [0], [1], [0, 0, 1, 1], [], []>} : vector<81x160xbf16>, vector<160x128xbf16>, vector<81x128xf32> -> vector<81x128xf32>
    %40 = arith.addf %39, %16 : vector<81x128xf32>
    %cst_37 = arith.constant 0.000000e+00 : f32
    %41 = vector.broadcast %cst_37 : f32 to vector<81x128xf32>
    %42 = arith.maximumf %40, %41 : vector<81x128xf32>
    %c160 = arith.constant 160 : index
    %c0_38 = arith.constant 0 : index
    %43 = vector.load %arg1[%c160, %c0_38] : memref<640x128xbf16, #tpu.memory_space<vmem>>, vector<160x128xbf16>
    %cst_39 = arith.constant dense<0.000000e+00> : vector<81x128xf32>
    %44 = tpu.matmul %0, %43, %cst_39 {dimension_numbers = #tpu.dot_dimension_numbers<[1], [0], [0], [1], [0, 0, 1, 1], [], []>} : vector<81x160xbf16>, vector<160x128xbf16>, vector<81x128xf32> -> vector<81x128xf32>
    %45 = arith.addf %44, %16 : vector<81x128xf32>
    %cst_40 = arith.constant 0.000000e+00 : f32
    %46 = vector.broadcast %cst_40 : f32 to vector<81x128xf32>
    %47 = arith.maximumf %45, %46 : vector<81x128xf32>
    %48 = arith.maximumf %42, %47 : vector<81x128xf32>
    %49 = arith.truncf %48 : vector<81x128xf32> to vector<81x128xbf16>
    %c240 = arith.constant 240 : index
    %c0_41 = arith.constant 0 : index
    %50 = vector.load %arg1[%c240, %c0_41] : memref<640x128xbf16, #tpu.memory_space<vmem>>, vector<160x128xbf16>
    %cst_42 = arith.constant dense<0.000000e+00> : vector<81x128xf32>
    %51 = tpu.matmul %0, %50, %cst_42 {dimension_numbers = #tpu.dot_dimension_numbers<[1], [0], [0], [1], [0, 0, 1, 1], [], []>} : vector<81x160xbf16>, vector<160x128xbf16>, vector<81x128xf32> -> vector<81x128xf32>
    %52 = arith.addf %51, %16 : vector<81x128xf32>
    %cst_43 = arith.constant 0.000000e+00 : f32
    %53 = vector.broadcast %cst_43 : f32 to vector<81x128xf32>
    %54 = arith.maximumf %52, %53 : vector<81x128xf32>
    %c320 = arith.constant 320 : index
    %c0_44 = arith.constant 0 : index
    %55 = vector.load %arg1[%c320, %c0_44] : memref<640x128xbf16, #tpu.memory_space<vmem>>, vector<160x128xbf16>
    %cst_45 = arith.constant dense<0.000000e+00> : vector<81x128xf32>
    %56 = tpu.matmul %0, %55, %cst_45 {dimension_numbers = #tpu.dot_dimension_numbers<[1], [0], [0], [1], [0, 0, 1, 1], [], []>} : vector<81x160xbf16>, vector<160x128xbf16>, vector<81x128xf32> -> vector<81x128xf32>
    %57 = arith.addf %56, %16 : vector<81x128xf32>
    %cst_46 = arith.constant 0.000000e+00 : f32
    %58 = vector.broadcast %cst_46 : f32 to vector<81x128xf32>
    %59 = arith.maximumf %57, %58 : vector<81x128xf32>
    %60 = arith.maximumf %54, %59 : vector<81x128xf32>
    %61 = arith.truncf %60 : vector<81x128xf32> to vector<81x128xbf16>
    %c400 = arith.constant 400 : index
    %c0_47 = arith.constant 0 : index
    %62 = vector.load %arg1[%c400, %c0_47] : memref<640x128xbf16, #tpu.memory_space<vmem>>, vector<160x128xbf16>
    %cst_48 = arith.constant dense<0.000000e+00> : vector<81x128xf32>
    %63 = tpu.matmul %0, %62, %cst_48 {dimension_numbers = #tpu.dot_dimension_numbers<[1], [0], [0], [1], [0, 0, 1, 1], [], []>} : vector<81x160xbf16>, vector<160x128xbf16>, vector<81x128xf32> -> vector<81x128xf32>
    %64 = arith.addf %63, %16 : vector<81x128xf32>
    %cst_49 = arith.constant 0.000000e+00 : f32
    %65 = vector.broadcast %cst_49 : f32 to vector<81x128xf32>
    %66 = arith.maximumf %64, %65 : vector<81x128xf32>
    %c480 = arith.constant 480 : index
    %c0_50 = arith.constant 0 : index
    %67 = vector.load %arg1[%c480, %c0_50] : memref<640x128xbf16, #tpu.memory_space<vmem>>, vector<160x128xbf16>
    %cst_51 = arith.constant dense<0.000000e+00> : vector<81x128xf32>
    %68 = tpu.matmul %0, %67, %cst_51 {dimension_numbers = #tpu.dot_dimension_numbers<[1], [0], [0], [1], [0, 0, 1, 1], [], []>} : vector<81x160xbf16>, vector<160x128xbf16>, vector<81x128xf32> -> vector<81x128xf32>
    %69 = arith.addf %68, %16 : vector<81x128xf32>
    %cst_52 = arith.constant 0.000000e+00 : f32
    %70 = vector.broadcast %cst_52 : f32 to vector<81x128xf32>
    %71 = arith.maximumf %69, %70 : vector<81x128xf32>
    %72 = arith.maximumf %66, %71 : vector<81x128xf32>
    %73 = arith.truncf %72 : vector<81x128xf32> to vector<81x128xbf16>
    %cst_53 = arith.constant dense<0.000000e+00> : vector<27x128xf32>
    %74 = tpu.matmul %5, %37, %cst_53 {dimension_numbers = #tpu.dot_dimension_numbers<[1], [0], [0], [1], [0, 0, 1, 1], [], []>} : vector<27x81xbf16>, vector<81x128xbf16>, vector<27x128xf32> -> vector<27x128xf32>
    %75 = arith.addf %74, %19 : vector<27x128xf32>
    %cst_54 = arith.constant 0.000000e+00 : f32
    %76 = vector.broadcast %cst_54 : f32 to vector<27x128xf32>
    %77 = arith.maximumf %75, %76 : vector<27x128xf32>
    %cst_55 = arith.constant dense<0.000000e+00> : vector<27x128xf32>
    %78 = tpu.matmul %3, %49, %cst_55 {dimension_numbers = #tpu.dot_dimension_numbers<[1], [0], [0], [1], [0, 0, 1, 1], [], []>} : vector<27x81xbf16>, vector<81x128xbf16>, vector<27x128xf32> -> vector<27x128xf32>
    %cst_56 = arith.constant dense<0.000000e+00> : vector<27x128xf32>
    %79 = tpu.matmul %5, %61, %cst_56 {dimension_numbers = #tpu.dot_dimension_numbers<[1], [0], [0], [1], [0, 0, 1, 1], [], []>} : vector<27x81xbf16>, vector<81x128xbf16>, vector<27x128xf32> -> vector<27x128xf32>
    %80 = arith.addf %78, %79 : vector<27x128xf32>
    %81 = arith.addf %80, %19 : vector<27x128xf32>
    %cst_57 = arith.constant 0.000000e+00 : f32
    %82 = vector.broadcast %cst_57 : f32 to vector<27x128xf32>
    %83 = arith.maximumf %81, %82 : vector<27x128xf32>
    %cst_58 = arith.constant dense<0.000000e+00> : vector<27x128xf32>
    %84 = tpu.matmul %3, %73, %cst_58 {dimension_numbers = #tpu.dot_dimension_numbers<[1], [0], [0], [1], [0, 0, 1, 1], [], []>} : vector<27x81xbf16>, vector<81x128xbf16>, vector<27x128xf32> -> vector<27x128xf32>
    %85 = arith.addf %84, %19 : vector<27x128xf32>
    %cst_59 = arith.constant 0.000000e+00 : f32
    %86 = vector.broadcast %cst_59 : f32 to vector<27x128xf32>
    %87 = arith.maximumf %85, %86 : vector<27x128xf32>
    %88 = arith.maximumf %77, %83 : vector<27x128xf32>
    %89 = arith.truncf %88 : vector<27x128xf32> to vector<27x128xbf16>
    %90 = arith.maximumf %83, %87 : vector<27x128xf32>
    %91 = arith.truncf %90 : vector<27x128xf32> to vector<27x128xbf16>
    %cst_60 = arith.constant dense<0.000000e+00> : vector<9x128xf32>
    %92 = tpu.matmul %9, %89, %cst_60 {dimension_numbers = #tpu.dot_dimension_numbers<[1], [0], [0], [1], [0, 0, 1, 1], [], []>} : vector<9x27xbf16>, vector<27x128xbf16>, vector<9x128xf32> -> vector<9x128xf32>
    %93 = arith.addf %92, %22 : vector<9x128xf32>
    %cst_61 = arith.constant 0.000000e+00 : f32
    %94 = vector.broadcast %cst_61 : f32 to vector<9x128xf32>
    %95 = arith.maximumf %93, %94 : vector<9x128xf32>
    %96 = arith.truncf %95 : vector<9x128xf32> to vector<9x128xbf16>
    %cst_62 = arith.constant dense<0.000000e+00> : vector<9x128xf32>
    %97 = tpu.matmul %7, %91, %cst_62 {dimension_numbers = #tpu.dot_dimension_numbers<[1], [0], [0], [1], [0, 0, 1, 1], [], []>} : vector<9x27xbf16>, vector<27x128xbf16>, vector<9x128xf32> -> vector<9x128xf32>
    %98 = arith.addf %97, %22 : vector<9x128xf32>
    %cst_63 = arith.constant 0.000000e+00 : f32
    %99 = vector.broadcast %cst_63 : f32 to vector<9x128xf32>
    %100 = arith.maximumf %98, %99 : vector<9x128xf32>
    %101 = arith.truncf %100 : vector<9x128xf32> to vector<9x128xbf16>
    %cst_64 = arith.constant dense<0.000000e+00> : vector<7x128xf32>
    %102 = tpu.matmul %11, %96, %cst_64 {dimension_numbers = #tpu.dot_dimension_numbers<[1], [0], [0], [1], [0, 0, 1, 1], [], []>} : vector<7x9xbf16>, vector<9x128xbf16>, vector<7x128xf32> -> vector<7x128xf32>
    %cst_65 = arith.constant dense<0.000000e+00> : vector<7x128xf32>
    %103 = tpu.matmul %13, %101, %cst_65 {dimension_numbers = #tpu.dot_dimension_numbers<[1], [0], [0], [1], [0, 0, 1, 1], [], []>} : vector<7x9xbf16>, vector<9x128xbf16>, vector<7x128xf32> -> vector<7x128xf32>
    %104 = arith.addf %102, %103 : vector<7x128xf32>
    %105 = arith.addf %104, %25 : vector<7x128xf32>
    %106 = arith.negf %105 : vector<7x128xf32>
    %107 = math.exp %106 : vector<7x128xf32>
    %cst_66 = arith.constant 1.000000e+00 : f32
    %108 = vector.broadcast %cst_66 : f32 to vector<7x128xf32>
    %109 = arith.addf %108, %107 : vector<7x128xf32>
    %110 = arith.divf %108, %109 : vector<7x128xf32>
    %c0_67 = arith.constant 0 : index
    %c0_68 = arith.constant 0 : index
    %111 = vector.load %arg11[%c0_67, %c0_68] : memref<7x128xf32, #tpu.memory_space<vmem>>, vector<7x128xf32>
    tpu.vector_store %arg11[%c0_67, %c0_68], %110 {strides = array<i32>} : memref<7x128xf32, #tpu.memory_space<vmem>>, vector<7x128xf32>,
    return
  }
  func.func @transform_0(%arg0: i32) -> (i32, i32) {
    %c0_i32 = arith.constant 0 : i32
    %c0_i32_0 = arith.constant 0 : i32
    return %c0_i32, %arg0 : i32, i32
  }
  func.func @transform_1(%arg0: i32) -> (i32, i32) {
    %c0_i32 = arith.constant 0 : i32
    %c0_i32_0 = arith.constant 0 : i32
    %c0_i32_1 = arith.constant 0 : i32
    return %c0_i32, %c0_i32_0 : i32, i32
  }
  func.func @transform_2(%arg0: i32) -> (i32, i32) {
    %c0_i32 = arith.constant 0 : i32
    %c0_i32_0 = arith.constant 0 : i32
    %c0_i32_1 = arith.constant 0 : i32
    return %c0_i32, %c0_i32_0 : i32, i32
  }
  func.func @transform_3(%arg0: i32) -> (i32, i32) {
    %c0_i32 = arith.constant 0 : i32
    %c0_i32_0 = arith.constant 0 : i32
    %c0_i32_1 = arith.constant 0 : i32
    return %c0_i32, %c0_i32_0 : i32, i32
  }
  func.func @transform_4(%arg0: i32) -> (i32, i32, i32) {
    %c0_i32 = arith.constant 0 : i32
    %c0_i32_0 = arith.constant 0 : i32
    %c0_i32_1 = arith.constant 0 : i32
    %c0_i32_2 = arith.constant 0 : i32
    return %c0_i32, %c0_i32_0, %c0_i32_1 : i32, i32, i32
  }
  func.func @transform_5(%arg0: i32) -> (i32, i32) {
    %c0_i32 = arith.constant 0 : i32
    %c0_i32_0 = arith.constant 0 : i32
    %c0_i32_1 = arith.constant 0 : i32
    return %c0_i32, %c0_i32_0 : i32, i32
  }
  func.func @transform_6(%arg0: i32) -> (i32, i32, i32) {
    %c0_i32 = arith.constant 0 : i32
    %c0_i32_0 = arith.constant 0 : i32
    %c0_i32_1 = arith.constant 0 : i32
    %c0_i32_2 = arith.constant 0 : i32
    return %c0_i32, %c0_i32_0, %c0_i32_1 : i32, i32, i32
  }
  func.func @transform_7(%arg0: i32) -> (i32, i32) {
    %c0_i32 = arith.constant 0 : i32
    %c0_i32_0 = arith.constant 0 : i32
    %c0_i32_1 = arith.constant 0 : i32
    return %c0_i32, %c0_i32_0 : i32, i32
  }
  func.func @transform_8(%arg0: i32) -> (i32, i32, i32) {
    %c0_i32 = arith.constant 0 : i32
    %c0_i32_0 = arith.constant 0 : i32
    %c0_i32_1 = arith.constant 0 : i32
    %c0_i32_2 = arith.constant 0 : i32
    return %c0_i32, %c0_i32_0, %c0_i32_1 : i32, i32, i32
  }
  func.func @transform_9(%arg0: i32) -> (i32, i32) {
    %c0_i32 = arith.constant 0 : i32
    %c0_i32_0 = arith.constant 0 : i32
    %c0_i32_1 = arith.constant 0 : i32
    return %c0_i32, %c0_i32_0 : i32, i32
  }
  func.func @transform_10(%arg0: i32) -> (i32, i32) {
    %c0_i32 = arith.constant 0 : i32
    %c0_i32_0 = arith.constant 0 : i32
    return %c0_i32, %arg0 : i32, i32
  }
}

</mosaic_0001>

<llo_original>
// kernel: cnn1d_forward.1
$region0: #{cnn1d_forward.1}
  #allocation0 [shape = 'u32[]', space=smem, size = 0x4, offset = 0x4, fixed_abs, tag = 'smem constant byte address 0x4 - core index']
  #allocation1 [shape = 'u32[144,128]{1,0:T(1,128)}', space=vmem, size = 0x12000, scoped, tag = 'internal scratch']
  %s0 = inlined_call_operand.vmem [shape: bf16[640,128], index: 0, kind: input, shape index: {}]
  %s1 = inlined_call_operand.vmem [shape: bf16[81,160], index: 1, kind: input, shape index: {}]
  %s2 = inlined_call_operand.vmem [shape: bf16[81,80], index: 2, kind: input, shape index: {}]
  %s3 = inlined_call_operand.vmem [shape: f32[81,1], index: 3, kind: input, shape index: {}]
  %s4 = inlined_call_operand.vmem [shape: bf16[2,27,81], index: 4, kind: input, shape index: {}]
  %s5 = inlined_call_operand.vmem [shape: f32[27,1], index: 5, kind: input, shape index: {}]
  %s6 = inlined_call_operand.vmem [shape: bf16[2,9,27], index: 6, kind: input, shape index: {}]
  %s7 = inlined_call_operand.vmem [shape: f32[9,1], index: 7, kind: input, shape index: {}]
  %s8 = inlined_call_operand.vmem [shape: bf16[2,7,9], index: 8, kind: input, shape index: {}]
  %s9 = inlined_call_operand.vmem [shape: f32[7,1], index: 9, kind: input, shape index: {}]
  %s10 = inlined_call_operand.vmem [shape: f32[7,128], index: 10, kind: output, shape index: {}]
  %s11 = sld [smem:[#allocation0]]
  $region50: #{cnn1d_forward.1} parent=0
    _
  %s13 = ssub.s32 1, %s11
  %s14 = scalar_select 0, %s13, %s11
  // Predicated region
  $region2: #{cnn1d_forward.1} parent=0 // pred_check
    _
  $region3: #{cnn1d_forward.1} parent=0 // pred_check_branch
    %16 = sbr.rel (0) target = $region5
  $region4: #{cnn1d_forward.1} parent=0 // pred_region
    _
  $region5: #{cnn1d_forward.1} parent=0 // pred_fallthru
    _
  // Predicated region
  $region6: #{cnn1d_forward.1} parent=0 // pred_check
    _
  $region7: #{cnn1d_forward.1} parent=0 // pred_check_branch
    %18 = sbr.rel (0) target = $region9
  $region8: #{cnn1d_forward.1} parent=0 // pred_region
    _
  $region9: #{cnn1d_forward.1} parent=0 // pred_fallthru
    _
  // Predicated region
  $region10: #{cnn1d_forward.1} parent=0 // pred_check
    _
  $region11: #{cnn1d_forward.1} parent=0 // pred_check_branch
    %20 = sbr.rel (0) target = $region13
  $region12: #{cnn1d_forward.1} parent=0 // pred_region
    _
  $region13: #{cnn1d_forward.1} parent=0 // pred_fallthru
    _
  // Predicated region
  $region14: #{cnn1d_forward.1} parent=0 // pred_check
    _
  $region15: #{cnn1d_forward.1} parent=0 // pred_check_branch
    %22 = sbr.rel (0) target = $region17
  $region16: #{cnn1d_forward.1} parent=0 // pred_region
    _
  $region17: #{cnn1d_forward.1} parent=0 // pred_fallthru
    _
  // Predicated region
  $region18: #{cnn1d_forward.1} parent=0 // pred_check
    _
  $region19: #{cnn1d_forward.1} parent=0 // pred_check_branch
    %24 = sbr.rel (0) target = $region21
  $region20: #{cnn1d_forward.1} parent=0 // pred_region
    _
  $region21: #{cnn1d_forward.1} parent=0 // pred_fallthru
    _
  // Predicated region
  $region22: #{cnn1d_forward.1} parent=0 // pred_check
    _
  $region23: #{cnn1d_forward.1} parent=0 // pred_check_branch
    %26 = sbr.rel (0) target = $region25
  $region24: #{cnn1d_forward.1} parent=0 // pred_region
    _
  $region25: #{cnn1d_forward.1} parent=0 // pred_fallthru
    _
  // Predicated region
  $region26: #{cnn1d_forward.1} parent=0 // pred_check
    _
  $region27: #{cnn1d_forward.1} parent=0 // pred_check_branch
    %28 = sbr.rel (0) target = $region29
  $region28: #{cnn1d_forward.1} parent=0 // pred_region
    _
  $region29: #{cnn1d_forward.1} parent=0 // pred_fallthru
    _
  // Predicated region
  $region30: #{cnn1d_forward.1} parent=0 // pred_check
    _
  $region31: #{cnn1d_forward.1} parent=0 // pred_check_branch
    %30 = sbr.rel (0) target = $region33
  $region32: #{cnn1d_forward.1} parent=0 // pred_region
    _
  $region33: #{cnn1d_forward.1} parent=0 // pred_fallthru
    _
  // Predicated region
  $region34: #{cnn1d_forward.1} parent=0 // pred_check
    _
  $region35: #{cnn1d_forward.1} parent=0 // pred_check_branch
    %32 = sbr.rel (0) target = $region37
  $region36: #{cnn1d_forward.1} parent=0 // pred_region
    _
  $region37: #{cnn1d_forward.1} parent=0 // pred_fallthru
    _
  // Predicated region
  $region38: #{cnn1d_forward.1} parent=0 // pred_check
    _
  $region39: #{cnn1d_forward.1} parent=0 // pred_check_branch
    %34 = sbr.rel (0) target = $region41
  $region40: #{cnn1d_forward.1} parent=0 // pred_region
    _
  $region41: #{cnn1d_forward.1} parent=0 // pred_fallthru
    _
  %v36 = vld [vmem:[%s1] sm:$0xff]
  %v37 = vld [vmem:[%s1 + $0x8] sm:$0xff]
  %v38 = vld [vmem:[%s1 + $0x10] sm:$0xff]
  %v39 = vld [vmem:[%s1 + $0x18] sm:$0xff]
  %v40 = vld [vmem:[%s1 + $0x20] sm:$0xff]
  %v41 = vld [vmem:[%s1 + $0x28] sm:$0xff]
  %v42 = vld [vmem:[%s1 + $0x30] sm:$0xff]
  %v43 = vld [vmem:[%s1 + $0x38] sm:$0xff]
  %v44 = vld [vmem:[%s1 + $0x40] sm:$0xff]
  %v45 = vld [vmem:[%s1 + $0x48] sm:$0xff]
  %v46 = vld [vmem:[%s1 + $0x50] sm:$0x11]
  %v47 = vld [vmem:[%s2] sm:$0xf]
  %v48 = vld [vmem:[%s2 + $0x4] sm:$0xf]
  %v49 = vld [vmem:[%s2 + $0x8] sm:$0xf]
  %v50 = vld [vmem:[%s2 + $0xc] sm:$0xf]
  %v51 = vld [vmem:[%s2 + $0x10] sm:$0xf]
  %v52 = vld [vmem:[%s2 + $0x14] sm:$0xf]
  %v53 = vld [vmem:[%s2 + $0x18] sm:$0xf]
  %v54 = vld [vmem:[%s2 + $0x1c] sm:$0xf]
  %v55 = vld [vmem:[%s2 + $0x20] sm:$0xf]
  %v56 = vld [vmem:[%s2 + $0x24] sm:$0xf]
  %v57 = vld [vmem:[%s2 + $0x28] sm:$0x1]
  %v58 = vld [vmem:[%s4] sm:$0xf]
  %v59 = vld [vmem:[%s4 + $0x4] sm:$0xf]
  %v60 = vld [vmem:[%s4 + $0x8] sm:$0xf]
  %v61 = vld [vmem:[%s4 + $0xc] sm:$0x3]
  %s62 = scalar_lea.vmem %s4, 16
  %v63 = vld [vmem:[%s62] sm:$0xf]
  %v64 = vld [vmem:[%s62 + $0x4] sm:$0xf]
  %v65 = vld [vmem:[%s62 + $0x8] sm:$0xf]
  %v66 = vld [vmem:[%s62 + $0xc] sm:$0x3]
  %v67 = vld [vmem:[%s6] sm:$0xf]
  %v68 = vld [vmem:[%s6 + $0x4] sm:$0x1]
  %s69 = scalar_lea.vmem %s6, 8
  %v70 = vld [vmem:[%s69] sm:$0xf]
  %v71 = vld [vmem:[%s69 + $0x4] sm:$0x1]
  %v72 = vld [vmem:[%s8] sm:$0xf]
  %s73 = scalar_lea.vmem %s8, 4
  %v74 = vld [vmem:[%s73] sm:$0xf]
  %v75 = vld [vmem:[%s3] sm:$0xff]
  %v76 = vld [vmem:[%s3 + $0x8] sm:$0xff]
  %v77 = vld [vmem:[%s3 + $0x10] sm:$0xff]
  %v78 = vld [vmem:[%s3 + $0x18] sm:$0xff]
  %v79 = vld [vmem:[%s3 + $0x20] sm:$0xff]
  %v80 = vld [vmem:[%s3 + $0x28] sm:$0xff]
  %v81 = vld [vmem:[%s3 + $0x30] sm:$0xff]
  %v82 = vld [vmem:[%s3 + $0x38] sm:$0xff]
  %v83 = vld [vmem:[%s3 + $0x40] sm:$0xff]
  %v84 = vld [vmem:[%s3 + $0x48] sm:$0xff]
  %v85 = vld [vmem:[%s3 + $0x50] sm:$0x1]
  %87 = vset.pattern.permute.xlu0 0
  %88 = vperm.xlu0 %87, %v75
  %v89 = vpop.permute.xlu0 %88
  %92 = vset.pattern.permute.xlu0 0
  %93 = vperm.xlu0 %92, %v76
  %v94 = vpop.permute.xlu0 %93
  %97 = vset.pattern.permute.xlu0 0
  %98 = vperm.xlu0 %97, %v77
  %v99 = vpop.permute.xlu0 %98
  %102 = vset.pattern.permute.xlu0 0
  %103 = vperm.xlu0 %102, %v78
  %v104 = vpop.permute.xlu0 %103
  %107 = vset.pattern.permute.xlu0 0
  %108 = vperm.xlu0 %107, %v79
  %v109 = vpop.permute.xlu0 %108
  %112 = vset.pattern.permute.xlu0 0
  %113 = vperm.xlu0 %112, %v80
  %v114 = vpop.permute.xlu0 %113
  %117 = vset.pattern.permute.xlu0 0
  %118 = vperm.xlu0 %117, %v81
  %v119 = vpop.permute.xlu0 %118
  %122 = vset.pattern.permute.xlu0 0
  %123 = vperm.xlu0 %122, %v82
  %v124 = vpop.permute.xlu0 %123
  %127 = vset.pattern.permute.xlu0 0
  %128 = vperm.xlu0 %127, %v83
  %v129 = vpop.permute.xlu0 %128
  %132 = vset.pattern.permute.xlu0 0
  %133 = vperm.xlu0 %132, %v84
  %v134 = vpop.permute.xlu0 %133
  %137 = vset.pattern.permute.xlu0 0
  %138 = vperm.xlu0 %137, %v85
  %v139 = vpop.permute.xlu0 %138
  %v141 = vld [vmem:[%s5] sm:$0xff]
  %v142 = vld [vmem:[%s5 + $0x8] sm:$0xff]
  %v143 = vld [vmem:[%s5 + $0x10] sm:$0xff]
  %v144 = vld [vmem:[%s5 + $0x18] sm:$0x7]
  %146 = vset.pattern.permute.xlu0 0
  %147 = vperm.xlu0 %146, %v141
  %v148 = vpop.permute.xlu0 %147
  %151 = vset.pattern.permute.xlu0 0
  %152 = vperm.xlu0 %151, %v142
  %v153 = vpop.permute.xlu0 %152
  %156 = vset.pattern.permute.xlu0 0
  %157 = vperm.xlu0 %156, %v143
  %v158 = vpop.permute.xlu0 %157
  %161 = vset.pattern.permute.xlu0 0
  %162 = vperm.xlu0 %161, %v144
  %v163 = vpop.permute.xlu0 %162
  %v165 = vld [vmem:[%s7] sm:$0xff]
  %v166 = vld [vmem:[%s7 + $0x8] sm:$0x1]
  %168 = vset.pattern.permute.xlu0 0
  %169 = vperm.xlu0 %168, %v165
  %v170 = vpop.permute.xlu0 %169
  %173 = vset.pattern.permute.xlu0 0
  %174 = vperm.xlu0 %173, %v166
  %v175 = vpop.permute.xlu0 %174
  %v177 = vld [vmem:[%s9] sm:$0x7f]
  %179 = vset.pattern.permute.xlu0 0
  %180 = vperm.xlu0 %179, %v177
  %v181 = vpop.permute.xlu0 %180
  %v183 = vld [vmem:[%s0] sm:$0xf]
  %v184 = vld [vmem:[%s0 + $0x4] sm:$0xf]
  %v185 = vld [vmem:[%s0 + $0x8] sm:$0xf]
  %v186 = vld [vmem:[%s0 + $0xc] sm:$0xf]
  %v187 = vld [vmem:[%s0 + $0x10] sm:$0xf]
  %v188 = vld [vmem:[%s0 + $0x14] sm:$0xf]
  %v189 = vld [vmem:[%s0 + $0x18] sm:$0xf]
  %v190 = vld [vmem:[%s0 + $0x1c] sm:$0xf]
  %v191 = vld [vmem:[%s0 + $0x20] sm:$0xf]
  %v192 = vld [vmem:[%s0 + $0x24] sm:$0xf]
  %v204 = vunpack.c.l.b16 %v47
  %v205 = vunpack.c.l.b16 %v48
  %v206 = vunpack.c.l.b16 %v49
  %v207 = vunpack.c.l.b16 %v50
  %v208 = vunpack.c.l.b16 %v51
  %v209 = vunpack.c.l.b16 %v52
  %v210 = vunpack.c.l.b16 %v53
  %v211 = vunpack.c.l.b16 %v54
  %v212 = vunpack.c.l.b16 %v55
  %v213 = vunpack.c.l.b16 %v56
  %v214 = vunpack.c.l.b16 %v57
  %v215 = vpack.c.b16 %v205, %v204
  %v216 = vpack.c.b16 %v207, %v206
  %v217 = vpack.c.b16 %v209, %v208
  %v218 = vpack.c.b16 %v211, %v210
  %v219 = vpack.c.b16 %v213, %v212
  %v220 = vpack.c.b16 %v214, %v214
  %v231 = vunpack.c.l.b16 %v183
  %v232 = vunpack.c.l.b16 %v184
  %v233 = vunpack.c.l.b16 %v185
  %v234 = vunpack.c.l.b16 %v186
  %v235 = vunpack.c.l.b16 %v187
  %v236 = vunpack.c.l.b16 %v188
  %v237 = vunpack.c.l.b16 %v189
  %v238 = vunpack.c.l.b16 %v190
  %v239 = vunpack.c.l.b16 %v191
  %v240 = vunpack.c.l.b16 %v192
  %v241 = vpack.c.b16 %v232, %v231
  %v242 = vpack.c.b16 %v234, %v233
  %v243 = vpack.c.b16 %v236, %v235
  %v244 = vpack.c.b16 %v238, %v237
  %v245 = vpack.c.b16 %v240, %v239
  %vm251 = vcmask 654336
  %v253 = vsel %vm251, %v215, 0
  %v256 = vsel %vm251, %v216, 0
  %v259 = vsel %vm251, %v217, 0
  %v262 = vsel %vm251, %v218, 0
  %v265 = vsel %vm251, %v219, 0
  %v268 = vsel %vm251, %v220, 0
  %270 = vmatprep.subr.bf16.mxu0 0
  %271 = vmatpush1.bf16.msra.mxu0 %v241
  %272 = vmatprep.subr.bf16.mxu0 0
  %273 = vmatpush1.bf16.msra.mxu0 %v242
  %274 = vmatprep.subr.bf16.mxu0 0
  %275 = vmatpush1.bf16.msra.mxu0 %v243
  %276 = vmatprep.subr.bf16.mxu0 0
  %277 = vmatpush1.bf16.msra.mxu0 %v244
  %278 = vmatprep.subr.bf16.mxu0 0
  %279 = vmatpush1.bf16.msra.mxu0 %v245
  %280 = vmatprep.subr.bf16.mxu0 0
  %281 = vmatpush1.bf16.msra.mxu0 0
  %282 = vmatprep.subr.bf16.mxu0 0
  %283 = vmatpush1.bf16.msra.mxu0 0
  %284 = vmatprep.subr.bf16.mxu0 0
  %285 = vmatpush1.bf16.msra.mxu0 0
  %286 = vmatprep.subr.bf16.mxu0 0
  %287 = vmatpush1.bf16.msra.mxu0 0
  %288 = vmatprep.subr.bf16.mxu0 0
  %289 = vmatpush1.bf16.msra.mxu0 0
  %290 = vmatprep.subr.bf16.mxu0 0
  %291 = vmatpush1.bf16.msra.mxu0 0
  %292 = vmatprep.subr.bf16.mxu0 0
  %293 = vmatpush1.bf16.msra.mxu0 0
  %294 = vmatprep.subr.bf16.mxu0 0
  %295 = vmatpush1.bf16.msra.mxu0 0
  %296 = vmatprep.subr.bf16.mxu0 0
  %297 = vmatpush1.bf16.msra.mxu0 0
  %298 = vmatprep.subr.bf16.mxu0 0
  %299 = vmatpush1.bf16.msra.mxu0 0
  %300 = vmatprep.subr.bf16.mxu0 0
  %301 = vmatpush1.bf16.msra.mxu0 0
  %302 = vmatprep.mubr.bf16.mxu0 0
  %303 = vmatmul.mubr.bf16.gmra.mrb[0].mxu0 %v253
  %v304 = vpop.f32.mrb[0].mxu0
  %v305 = vadd.f32 %v89, %v304
  %v306 = vpop.f32.mrb[0].mxu0
  %v307 = vpop.f32.mrb[0].mxu0
  %v308 = vadd.f32 %v94, %v307
  %v309 = vpop.f32.mrb[0].mxu0
  %310 = vmatprep.mubr.bf16.mxu0 0
  %311 = vmatmul.mubr.bf16.gmra.mrb[0].mxu0 %v256
  %v312 = vpop.f32.mrb[0].mxu0
  %v313 = vadd.f32 %v99, %v312
  %v314 = vpop.f32.mrb[0].mxu0
  %v315 = vpop.f32.mrb[0].mxu0
  %v316 = vadd.f32 %v104, %v315
  %v317 = vpop.f32.mrb[0].mxu0
  %318 = vmatprep.mubr.bf16.mxu0 0
  %319 = vmatmul.mubr.bf16.gmra.mrb[0].mxu0 %v259
  %v320 = vpop.f32.mrb[0].mxu0
  %v321 = vadd.f32 %v109, %v320
  %v322 = vpop.f32.mrb[0].mxu0
  %v323 = vpop.f32.mrb[0].mxu0
  %v324 = vadd.f32 %v114, %v323
  %v325 = vpop.f32.mrb[0].mxu0
  %326 = vmatprep.mubr.bf16.mxu0 0
  %327 = vmatmul.mubr.bf16.gmra.mrb[0].mxu0 %v262
  %v328 = vpop.f32.mrb[0].mxu0
  %v329 = vadd.f32 %v119, %v328
  %v330 = vpop.f32.mrb[0].mxu0
  %v331 = vpop.f32.mrb[0].mxu0
  %v332 = vadd.f32 %v124, %v331
  %v333 = vpop.f32.mrb[0].mxu0
  %334 = vmatprep.mubr.bf16.mxu0 0
  %335 = vmatmul.mubr.bf16.gmra.mrb[0].mxu0 %v265
  %v336 = vpop.f32.mrb[0].mxu0
  %v337 = vadd.f32 %v129, %v336
  %v338 = vpop.f32.mrb[0].mxu0
  %v339 = vpop.f32.mrb[0].mxu0
  %v340 = vadd.f32 %v134, %v339
  %v341 = vpop.f32.mrb[0].mxu0
  %342 = vmatprep.mubr.bf16.mxu0 0
  %343 = vmatmul.mubr.bf16.gmra.mrb[0].mxu0 %v268
  %v344 = vpop.f32.mrb[0].mxu0
  %v345 = vadd.f32 %v139, %v344
  %v346 = vpop.f32.mrb[0].mxu0
  %v347 = vpop.f32.mrb[0].mxu0
  %v348 = vpop.f32.mrb[0].mxu0
  %349 = vdwg.mxu0
  %v350 = vmax.f32 %v305, 0.0
  %v351 = vmax.f32 %v308, 0.0
  %v352 = vmax.f32 %v313, 0.0
  %v353 = vmax.f32 %v316, 0.0
  %v354 = vmax.f32 %v321, 0.0
  %v355 = vmax.f32 %v324, 0.0
  %v356 = vmax.f32 %v329, 0.0
  %v357 = vmax.f32 %v332, 0.0
  %v358 = vmax.f32 %v337, 0.0
  %v359 = vmax.f32 %v340, 0.0
  %v360 = vmax.f32 %v345, 0.0
  %v361 = vld [vmem:[%s0] sm:$0xf]
  %v362 = vld [vmem:[%s0 + $0x4] sm:$0xf]
  %v363 = vld [vmem:[%s0 + $0x8] sm:$0xf]
  %v364 = vld [vmem:[%s0 + $0xc] sm:$0xf]
  %v365 = vld [vmem:[%s0 + $0x10] sm:$0xf]
  %v366 = vld [vmem:[%s0 + $0x14] sm:$0xf]
  %v367 = vld [vmem:[%s0 + $0x18] sm:$0xf]
  %v368 = vld [vmem:[%s0 + $0x1c] sm:$0xf]
  %v369 = vld [vmem:[%s0 + $0x20] sm:$0xf]
  %v370 = vld [vmem:[%s0 + $0x24] sm:$0xf]
  %v371 = vld [vmem:[%s0 + $0x28] sm:$0xf]
  %v372 = vld [vmem:[%s0 + $0x2c] sm:$0xf]
  %v373 = vld [vmem:[%s0 + $0x30] sm:$0xf]
  %v374 = vld [vmem:[%s0 + $0x34] sm:$0xf]
  %v375 = vld [vmem:[%s0 + $0x38] sm:$0xf]
  %v376 = vld [vmem:[%s0 + $0x3c] sm:$0xf]
  %v377 = vld [vmem:[%s0 + $0x40] sm:$0xf]
  %v378 = vld [vmem:[%s0 + $0x44] sm:$0xf]
  %v379 = vld [vmem:[%s0 + $0x48] sm:$0xf]
  %v380 = vld [vmem:[%s0 + $0x4c] sm:$0xf]
  %v392 = vunpack.c.l.b16 %v36
  %v393 = vunpack.c.h.b16 %v36
  %v394 = vunpack.c.l.b16 %v37
  %v395 = vunpack.c.h.b16 %v37
  %v396 = vunpack.c.l.b16 %v38
  %v397 = vunpack.c.h.b16 %v38
  %v398 = vunpack.c.l.b16 %v39
  %v399 = vunpack.c.h.b16 %v39
  %v400 = vunpack.c.l.b16 %v40
  %v401 = vunpack.c.h.b16 %v40
  %v402 = vunpack.c.l.b16 %v41
  %v403 = vunpack.c.h.b16 %v41
  %v404 = vunpack.c.l.b16 %v42
  %v405 = vunpack.c.h.b16 %v42
  %v406 = vunpack.c.l.b16 %v43
  %v407 = vunpack.c.h.b16 %v43
  %v408 = vunpack.c.l.b16 %v44
  %v409 = vunpack.c.h.b16 %v44
  %v410 = vunpack.c.l.b16 %v45
  %v411 = vunpack.c.h.b16 %v45
  %v412 = vunpack.c.l.b16 %v46
  %v413 = vunpack.c.h.b16 %v46
  %v414 = vpack.c.b16 %v394, %v392
  %v415 = vpack.c.b16 %v395, %v393
  %v416 = vpack.c.b16 %v398, %v396
  %v417 = vpack.c.b16 %v399, %v397
  %v418 = vpack.c.b16 %v402, %v400
  %v419 = vpack.c.b16 %v403, %v401
  %v420 = vpack.c.b16 %v406, %v404
  %v421 = vpack.c.b16 %v407, %v405
  %v422 = vpack.c.b16 %v410, %v408
  %v423 = vpack.c.b16 %v411, %v409
  %v424 = vpack.c.b16 %v412, %v412
  %v425 = vpack.c.b16 %v413, %v413
  %v452 = vunpack.c.l.b16 %v361
  %v453 = vunpack.c.l.b16 %v362
  %v454 = vunpack.c.l.b16 %v363
  %v455 = vunpack.c.l.b16 %v364
  %v456 = vunpack.c.l.b16 %v365
  %v457 = vunpack.c.l.b16 %v366
  %v458 = vunpack.c.l.b16 %v367
  %v459 = vunpack.c.l.b16 %v368
  %v460 = vunpack.c.l.b16 %v369
  %v461 = vunpack.c.l.b16 %v370
  %v462 = vunpack.c.l.b16 %v371
  %v463 = vunpack.c.l.b16 %v372
  %v464 = vunpack.c.l.b16 %v373
  %v465 = vunpack.c.l.b16 %v374
  %v466 = vunpack.c.l.b16 %v375
  %v467 = vunpack.c.l.b16 %v376
  %v468 = vunpack.c.l.b16 %v377
  %v469 = vunpack.c.l.b16 %v378
  %v470 = vunpack.c.l.b16 %v379
  %v471 = vunpack.c.l.b16 %v380
  %v472 = vpack.c.b16 %v453, %v452
  %v473 = vpack.c.b16 %v455, %v454
  %v474 = vpack.c.b16 %v457, %v456
  %v475 = vpack.c.b16 %v459, %v458
  %v476 = vpack.c.b16 %v461, %v460
  %v477 = vpack.c.b16 %v463, %v462
  %v478 = vpack.c.b16 %v465, %v464
  %v479 = vpack.c.b16 %v467, %v466
  %v480 = vpack.c.b16 %v469, %v468
  %v481 = vpack.c.b16 %v471, %v470
  %vm492 = vcmask 261120
  %v494 = vsel %vm492, %v415, 0
  %v497 = vsel %vm492, %v417, 0
  %v500 = vsel %vm492, %v419, 0
  %v503 = vsel %vm492, %v421, 0
  %v506 = vsel %vm492, %v423, 0
  %v509 = vsel %vm492, %v425, 0
  %511 = vmatprep.subr.bf16.mxu0 0
  %512 = vmatpush1.bf16.msra.mxu0 %v472
  %513 = vmatprep.subr.bf16.mxu0 0
  %514 = vmatpush1.bf16.msra.mxu0 %v473
  %515 = vmatprep.subr.bf16.mxu0 0
  %516 = vmatpush1.bf16.msra.mxu0 %v474
  %517 = vmatprep.subr.bf16.mxu0 0
  %518 = vmatpush1.bf16.msra.mxu0 %v475
  %519 = vmatprep.subr.bf16.mxu0 0
  %520 = vmatpush1.bf16.msra.mxu0 %v476
  %521 = vmatprep.subr.bf16.mxu0 0
  %522 = vmatpush1.bf16.msra.mxu0 %v477
  %523 = vmatprep.subr.bf16.mxu0 0
  %524 = vmatpush1.bf16.msra.mxu0 %v478
  %525 = vmatprep.subr.bf16.mxu0 0
  %526 = vmatpush1.bf16.msra.mxu0 %v479
  %527 = vmatprep.subr.bf16.mxu0 0
  %528 = vmatpush1.bf16.msra.mxu0 %v480
  %529 = vmatprep.subr.bf16.mxu0 0
  %530 = vmatpush1.bf16.msra.mxu0 %v481
  %531 = vmatprep.subr.bf16.mxu0 0
  %532 = vmatpush1.bf16.msra.mxu0 0
  %533 = vmatprep.subr.bf16.mxu0 0
  %534 = vmatpush1.bf16.msra.mxu0 0
  %535 = vmatprep.subr.bf16.mxu0 0
  %536 = vmatpush1.bf16.msra.mxu0 0
  %537 = vmatprep.subr.bf16.mxu0 0
  %538 = vmatpush1.bf16.msra.mxu0 0
  %539 = vmatprep.subr.bf16.mxu0 0
  %540 = vmatpush1.bf16.msra.mxu0 0
  %541 = vmatprep.subr.bf16.mxu0 0
  %542 = vmatpush1.bf16.msra.mxu0 0
  %543 = vmatprep.mubr.bf16.mxu0 %v494
  %544 = vmatmul.mubr.bf16.gmra.mrb[0].mxu0 %v414
  %v545 = vpop.f32.mrb[0].mxu0
  %v546 = vadd.f32 %v89, %v545
  %v547 = vpop.f32.mrb[0].mxu0
  %v548 = vpop.f32.mrb[0].mxu0
  %v549 = vadd.f32 %v94, %v548
  %v550 = vpop.f32.mrb[0].mxu0
  %551 = vmatprep.mubr.bf16.mxu0 %v497
  %552 = vmatmul.mubr.bf16.gmra.mrb[0].mxu0 %v416
  %v553 = vpop.f32.mrb[0].mxu0
  %v554 = vadd.f32 %v99, %v553
  %v555 = vpop.f32.mrb[0].mxu0
  %v556 = vpop.f32.mrb[0].mxu0
  %v557 = vadd.f32 %v104, %v556
  %v558 = vpop.f32.mrb[0].mxu0
  %559 = vmatprep.mubr.bf16.mxu0 %v500
  %560 = vmatmul.mubr.bf16.gmra.mrb[0].mxu0 %v418
  %v561 = vpop.f32.mrb[0].mxu0
  %v562 = vadd.f32 %v109, %v561
  %v563 = vpop.f32.mrb[0].mxu0
  %v564 = vpop.f32.mrb[0].mxu0
  %v565 = vadd.f32 %v114, %v564
  %v566 = vpop.f32.mrb[0].mxu0
  %567 = vmatprep.mubr.bf16.mxu0 %v503
  %568 = vmatmul.mubr.bf16.gmra.mrb[0].mxu0 %v420
  %v569 = vpop.f32.mrb[0].mxu0
  %v570 = vadd.f32 %v119, %v569
  %v571 = vpop.f32.mrb[0].mxu0
  %v572 = vpop.f32.mrb[0].mxu0
  %v573 = vadd.f32 %v124, %v572
  %v574 = vpop.f32.mrb[0].mxu0
  %575 = vmatprep.mubr.bf16.mxu0 %v506
  %576 = vmatmul.mubr.bf16.gmra.mrb[0].mxu0 %v422
  %v577 = vpop.f32.mrb[0].mxu0
  %v578 = vadd.f32 %v129, %v577
  %v579 = vpop.f32.mrb[0].mxu0
  %v580 = vpop.f32.mrb[0].mxu0
  %v581 = vadd.f32 %v134, %v580
  %v582 = vpop.f32.mrb[0].mxu0
  %583 = vmatprep.mubr.bf16.mxu0 %v509
  %584 = vmatmul.mubr.bf16.gmra.mrb[0].mxu0 %v424
  %v585 = vpop.f32.mrb[0].mxu0
  %v586 = vadd.f32 %v139, %v585
  %v587 = vpop.f32.mrb[0].mxu0
  %v588 = vpop.f32.mrb[0].mxu0
  %v589 = vpop.f32.mrb[0].mxu0
  %590 = vdwg.mxu0
  %v591 = vmax.f32 %v546, 0.0
  %v592 = vmax.f32 %v549, 0.0
  %v593 = vmax.f32 %v554, 0.0
  %v594 = vmax.f32 %v557, 0.0
  %v595 = vmax.f32 %v562, 0.0
  %v596 = vmax.f32 %v565, 0.0
  %v597 = vmax.f32 %v570, 0.0
  %v598 = vmax.f32 %v573, 0.0
  %v599 = vmax.f32 %v578, 0.0
  %v600 = vmax.f32 %v581, 0.0
  %v601 = vmax.f32 %v586, 0.0
  %v602 = vmax.f32 %v350, %v591
  %v603 = vmax.f32 %v351, %v592
  %v604 = vmax.f32 %v352, %v593
  %v605 = vmax.f32 %v353, %v594
  %v606 = vmax.f32 %v354, %v595
  %v607 = vmax.f32 %v355, %v596
  %v608 = vmax.f32 %v356, %v597
  %v609 = vmax.f32 %v357, %v598
  %v610 = vmax.f32 %v358, %v599
  %v611 = vmax.f32 %v359, %v600
  %v612 = vmax.f32 %v360, %v601
  %v613 = vpack.c.bf16 %v603, %v602
  %v614 = vpack.c.bf16 %v605, %v604
  %v615 = vpack.c.bf16 %v607, %v606
  %v616 = vpack.c.bf16 %v609, %v608
  %v617 = vpack.c.bf16 %v611, %v610
  %v618 = vpack.c.bf16 %v612, %v612
  %v619 = vld [vmem:[%s0 + $0x28] sm:$0xf]
  %v620 = vld [vmem:[%s0 + $0x2c] sm:$0xf]
  %v621 = vld [vmem:[%s0 + $0x30] sm:$0xf]
  %v622 = vld [vmem:[%s0 + $0x34] sm:$0xf]
  %v623 = vld [vmem:[%s0 + $0x38] sm:$0xf]
  %v624 = vld [vmem:[%s0 + $0x3c] sm:$0xf]
  %v625 = vld [vmem:[%s0 + $0x40] sm:$0xf]
  %v626 = vld [vmem:[%s0 + $0x44] sm:$0xf]
  %v627 = vld [vmem:[%s0 + $0x48] sm:$0xf]
  %v628 = vld [vmem:[%s0 + $0x4c] sm:$0xf]
  %v629 = vld [vmem:[%s0 + $0x50] sm:$0xf]
  %v630 = vld [vmem:[%s0 + $0x54] sm:$0xf]
  %v631 = vld [vmem:[%s0 + $0x58] sm:$0xf]
  %v632 = vld [vmem:[%s0 + $0x5c] sm:$0xf]
  %v633 = vld [vmem:[%s0 + $0x60] sm:$0xf]
  %v634 = vld [vmem:[%s0 + $0x64] sm:$0xf]
  %v635 = vld [vmem:[%s0 + $0x68] sm:$0xf]
  %v636 = vld [vmem:[%s0 + $0x6c] sm:$0xf]
  %v637 = vld [vmem:[%s0 + $0x70] sm:$0xf]
  %v638 = vld [vmem:[%s0 + $0x74] sm:$0xf]
  %v659 = vunpack.c.l.b16 %v619
  %v660 = vunpack.c.l.b16 %v620
  %v661 = vunpack.c.l.b16 %v621
  %v662 = vunpack.c.l.b16 %v622
  %v663 = vunpack.c.l.b16 %v623
  %v664 = vunpack.c.l.b16 %v624
  %v665 = vunpack.c.l.b16 %v625
  %v666 = vunpack.c.l.b16 %v626
  %v667 = vunpack.c.l.b16 %v627
  %v668 = vunpack.c.l.b16 %v628
  %v669 = vunpack.c.l.b16 %v629
  %v670 = vunpack.c.l.b16 %v630
  %v671 = vunpack.c.l.b16 %v631
  %v672 = vunpack.c.l.b16 %v632
  %v673 = vunpack.c.l.b16 %v633
  %v674 = vunpack.c.l.b16 %v634
  %v675 = vunpack.c.l.b16 %v635
  %v676 = vunpack.c.l.b16 %v636
  %v677 = vunpack.c.l.b16 %v637
  %v678 = vunpack.c.l.b16 %v638
  %v679 = vpack.c.b16 %v660, %v659
  %v680 = vpack.c.b16 %v662, %v661
  %v681 = vpack.c.b16 %v664, %v663
  %v682 = vpack.c.b16 %v666, %v665
  %v683 = vpack.c.b16 %v668, %v667
  %v684 = vpack.c.b16 %v670, %v669
  %v685 = vpack.c.b16 %v672, %v671
  %v686 = vpack.c.b16 %v674, %v673
  %v687 = vpack.c.b16 %v676, %v675
  %v688 = vpack.c.b16 %v678, %v677
  %699 = vmatprep.subr.bf16.mxu0 0
  %700 = vmatpush1.bf16.msra.mxu0 %v679
  %701 = vmatprep.subr.bf16.mxu0 0
  %702 = vmatpush1.bf16.msra.mxu0 %v680
  %703 = vmatprep.subr.bf16.mxu0 0
  %704 = vmatpush1.bf16.msra.mxu0 %v681
  %705 = vmatprep.subr.bf16.mxu0 0
  %706 = vmatpush1.bf16.msra.mxu0 %v682
  %707 = vmatprep.subr.bf16.mxu0 0
  %708 = vmatpush1.bf16.msra.mxu0 %v683
  %709 = vmatprep.subr.bf16.mxu0 0
  %710 = vmatpush1.bf16.msra.mxu0 %v684
  %711 = vmatprep.subr.bf16.mxu0 0
  %712 = vmatpush1.bf16.msra.mxu0 %v685
  %713 = vmatprep.subr.bf16.mxu0 0
  %714 = vmatpush1.bf16.msra.mxu0 %v686
  %715 = vmatprep.subr.bf16.mxu0 0
  %716 = vmatpush1.bf16.msra.mxu0 %v687
  %717 = vmatprep.subr.bf16.mxu0 0
  %718 = vmatpush1.bf16.msra.mxu0 %v688
  %719 = vmatprep.subr.bf16.mxu0 0
  %720 = vmatpush1.bf16.msra.mxu0 0
  %721 = vmatprep.subr.bf16.mxu0 0
  %722 = vmatpush1.bf16.msra.mxu0 0
  %723 = vmatprep.subr.bf16.mxu0 0
  %724 = vmatpush1.bf16.msra.mxu0 0
  %725 = vmatprep.subr.bf16.mxu0 0
  %726 = vmatpush1.bf16.msra.mxu0 0
  %727 = vmatprep.subr.bf16.mxu0 0
  %728 = vmatpush1.bf16.msra.mxu0 0
  %729 = vmatprep.subr.bf16.mxu0 0
  %730 = vmatpush1.bf16.msra.mxu0 0
  %731 = vmatprep.mubr.bf16.mxu0 %v494
  %732 = vmatmul.mubr.bf16.gmra.mrb[0].mxu0 %v414
  %v733 = vpop.f32.mrb[0].mxu0
  %v734 = vadd.f32 %v89, %v733
  %v735 = vpop.f32.mrb[0].mxu0
  %v736 = vpop.f32.mrb[0].mxu0
  %v737 = vadd.f32 %v94, %v736
  %v738 = vpop.f32.mrb[0].mxu0
  %739 = vmatprep.mubr.bf16.mxu0 %v497
  %740 = vmatmul.mubr.bf16.gmra.mrb[0].mxu0 %v416
  %v741 = vpop.f32.mrb[0].mxu0
  %v742 = vadd.f32 %v99, %v741
  %v743 = vpop.f32.mrb[0].mxu0
  %v744 = vpop.f32.mrb[0].mxu0
  %v745 = vadd.f32 %v104, %v744
  %v746 = vpop.f32.mrb[0].mxu0
  %747 = vmatprep.mubr.bf16.mxu0 %v500
  %748 = vmatmul.mubr.bf16.gmra.mrb[0].mxu0 %v418
  %v749 = vpop.f32.mrb[0].mxu0
  %v750 = vadd.f32 %v109, %v749
  %v751 = vpop.f32.mrb[0].mxu0
  %v752 = vpop.f32.mrb[0].mxu0
  %v753 = vadd.f32 %v114, %v752
  %v754 = vpop.f32.mrb[0].mxu0
  %755 = vmatprep.mubr.bf16.mxu0 %v503
  %756 = vmatmul.mubr.bf16.gmra.mrb[0].mxu0 %v420
  %v757 = vpop.f32.mrb[0].mxu0
  %v758 = vadd.f32 %v119, %v757
  %v759 = vpop.f32.mrb[0].mxu0
  %v760 = vpop.f32.mrb[0].mxu0
  %v761 = vadd.f32 %v124, %v760
  %v762 = vpop.f32.mrb[0].mxu0
  %763 = vmatprep.mubr.bf16.mxu0 %v506
  %764 = vmatmul.mubr.bf16.gmra.mrb[0].mxu0 %v422
  %v765 = vpop.f32.mrb[0].mxu0
  %v766 = vadd.f32 %v129, %v765
  %v767 = vpop.f32.mrb[0].mxu0
  %v768 = vpop.f32.mrb[0].mxu0
  %v769 = vadd.f32 %v134, %v768
  %v770 = vpop.f32.mrb[0].mxu0
  %771 = vmatprep.mubr.bf16.mxu0 %v509
  %772 = vmatmul.mubr.bf16.gmra.mrb[0].mxu0 %v424
  %v773 = vpop.f32.mrb[0].mxu0
  %v774 = vadd.f32 %v139, %v773
  %v775 = vpop.f32.mrb[0].mxu0
  %v776 = vpop.f32.mrb[0].mxu0
  %v777 = vpop.f32.mrb[0].mxu0
  %778 = vdwg.mxu0
  %v779 = vmax.f32 %v734, 0.0
  %v780 = vmax.f32 %v737, 0.0
  %v781 = vmax.f32 %v742, 0.0
  %v782 = vmax.f32 %v745, 0.0
  %v783 = vmax.f32 %v750, 0.0
  %v784 = vmax.f32 %v753, 0.0
  %v785 = vmax.f32 %v758, 0.0
  %v786 = vmax.f32 %v761, 0.0
  %v787 = vmax.f32 %v766, 0.0
  %v788 = vmax.f32 %v769, 0.0
  %v789 = vmax.f32 %v774, 0.0
  %v790 = vld [vmem:[%s0 + $0x50] sm:$0xf]
  %v791 = vld [vmem:[%s0 + $0x54] sm:$0xf]
  %v792 = vld [vmem:[%s0 + $0x58] sm:$0xf]
  %v793 = vld [vmem:[%s0 + $0x5c] sm:$0xf]
  %v794 = vld [vmem:[%s0 + $0x60] sm:$0xf]
  %v795 = vld [vmem:[%s0 + $0x64] sm:$0xf]
  %v796 = vld [vmem:[%s0 + $0x68] sm:$0xf]
  %v797 = vld [vmem:[%s0 + $0x6c] sm:$0xf]
  %v798 = vld [vmem:[%s0 + $0x70] sm:$0xf]
  %v799 = vld [vmem:[%s0 + $0x74] sm:$0xf]
  %v800 = vld [vmem:[%s0 + $0x78] sm:$0xf]
  %v801 = vld [vmem:[%s0 + $0x7c] sm:$0xf]
  %v802 = vld [vmem:[%s0 + $0x80] sm:$0xf]
  %v803 = vld [vmem:[%s0 + $0x84] sm:$0xf]
  %v804 = vld [vmem:[%s0 + $0x88] sm:$0xf]
  %v805 = vld [vmem:[%s0 + $0x8c] sm:$0xf]
  %v806 = vld [vmem:[%s0 + $0x90] sm:$0xf]
  %v807 = vld [vmem:[%s0 + $0x94] sm:$0xf]
  %v808 = vld [vmem:[%s0 + $0x98] sm:$0xf]
  %v809 = vld [vmem:[%s0 + $0x9c] sm:$0xf]
  %v830 = vunpack.c.l.b16 %v790
  %v831 = vunpack.c.l.b16 %v791
  %v832 = vunpack.c.l.b16 %v792
  %v833 = vunpack.c.l.b16 %v793
  %v834 = vunpack.c.l.b16 %v794
  %v835 = vunpack.c.l.b16 %v795
  %v836 = vunpack.c.l.b16 %v796
  %v837 = vunpack.c.l.b16 %v797
  %v838 = vunpack.c.l.b16 %v798
  %v839 = vunpack.c.l.b16 %v799
  %v840 = vunpack.c.l.b16 %v800
  %v841 = vunpack.c.l.b16 %v801
  %v842 = vunpack.c.l.b16 %v802
  %v843 = vunpack.c.l.b16 %v803
  %v844 = vunpack.c.l.b16 %v804
  %v845 = vunpack.c.l.b16 %v805
  %v846 = vunpack.c.l.b16 %v806
  %v847 = vunpack.c.l.b16 %v807
  %v848 = vunpack.c.l.b16 %v808
  %v849 = vunpack.c.l.b16 %v809
  %v850 = vpack.c.b16 %v831, %v830
  %v851 = vpack.c.b16 %v833, %v832
  %v852 = vpack.c.b16 %v835, %v834
  %v853 = vpack.c.b16 %v837, %v836
  %v854 = vpack.c.b16 %v839, %v838
  %v855 = vpack.c.b16 %v841, %v840
  %v856 = vpack.c.b16 %v843, %v842
  %v857 = vpack.c.b16 %v845, %v844
  %v858 = vpack.c.b16 %v847, %v846
  %v859 = vpack.c.b16 %v849, %v848
  %870 = vmatprep.subr.bf16.mxu0 0
  %871 = vmatpush1.bf16.msra.mxu0 %v850
  %872 = vmatprep.subr.bf16.mxu0 0
  %873 = vmatpush1.bf16.msra.mxu0 %v851
  %874 = vmatprep.subr.bf16.mxu0 0
  %875 = vmatpush1.bf16.msra.mxu0 %v852
  %876 = vmatprep.subr.bf16.mxu0 0
  %877 = vmatpush1.bf16.msra.mxu0 %v853
  %878 = vmatprep.subr.bf16.mxu0 0
  %879 = vmatpush1.bf16.msra.mxu0 %v854
  %880 = vmatprep.subr.bf16.mxu0 0
  %881 = vmatpush1.bf16.msra.mxu0 %v855
  %882 = vmatprep.subr.bf16.mxu0 0
  %883 = vmatpush1.bf16.msra.mxu0 %v856
  %884 = vmatprep.subr.bf16.mxu0 0
  %885 = vmatpush1.bf16.msra.mxu0 %v857
  %886 = vmatprep.subr.bf16.mxu0 0
  %887 = vmatpush1.bf16.msra.mxu0 %v858
  %888 = vmatprep.subr.bf16.mxu0 0
  %889 = vmatpush1.bf16.msra.mxu0 %v859
  %890 = vmatprep.subr.bf16.mxu0 0
  %891 = vmatpush1.bf16.msra.mxu0 0
  %892 = vmatprep.subr.bf16.mxu0 0
  %893 = vmatpush1.bf16.msra.mxu0 0
  %894 = vmatprep.subr.bf16.mxu0 0
  %895 = vmatpush1.bf16.msra.mxu0 0
  %896 = vmatprep.subr.bf16.mxu0 0
  %897 = vmatpush1.bf16.msra.mxu0 0
  %898 = vmatprep.subr.bf16.mxu0 0
  %899 = vmatpush1.bf16.msra.mxu0 0
  %900 = vmatprep.subr.bf16.mxu0 0
  %901 = vmatpush1.bf16.msra.mxu0 0
  %902 = vmatprep.mubr.bf16.mxu0 %v494
  %903 = vmatmul.mubr.bf16.gmra.mrb[0].mxu0 %v414
  %v904 = vpop.f32.mrb[0].mxu0
  %v905 = vadd.f32 %v89, %v904
  %v906 = vpop.f32.mrb[0].mxu0
  %v907 = vpop.f32.mrb[0].mxu0
  %v908 = vadd.f32 %v94, %v907
  %v909 = vpop.f32.mrb[0].mxu0
  %910 = vmatprep.mubr.bf16.mxu0 %v497
  %911 = vmatmul.mubr.bf16.gmra.mrb[0].mxu0 %v416
  %v912 = vpop.f32.mrb[0].mxu0
  %v913 = vadd.f32 %v99, %v912
  %v914 = vpop.f32.mrb[0].mxu0
  %v915 = vpop.f32.mrb[0].mxu0
  %v916 = vadd.f32 %v104, %v915
  %v917 = vpop.f32.mrb[0].mxu0
  %918 = vmatprep.mubr.bf16.mxu0 %v500
  %919 = vmatmul.mubr.bf16.gmra.mrb[0].mxu0 %v418
  %v920 = vpop.f32.mrb[0].mxu0
  %v921 = vadd.f32 %v109, %v920
  %v922 = vpop.f32.mrb[0].mxu0
  %v923 = vpop.f32.mrb[0].mxu0
  %v924 = vadd.f32 %v114, %v923
  %v925 = vpop.f32.mrb[0].mxu0
  %926 = vmatprep.mubr.bf16.mxu0 %v503
  %927 = vmatmul.mubr.bf16.gmra.mrb[0].mxu0 %v420
  %v928 = vpop.f32.mrb[0].mxu0
  %v929 = vadd.f32 %v119, %v928
  %v930 = vpop.f32.mrb[0].mxu0
  %v931 = vpop.f32.mrb[0].mxu0
  %v932 = vadd.f32 %v124, %v931
  %v933 = vpop.f32.mrb[0].mxu0
  %934 = vmatprep.mubr.bf16.mxu0 %v506
  %935 = vmatmul.mubr.bf16.gmra.mrb[0].mxu0 %v422
  %v936 = vpop.f32.mrb[0].mxu0
  %v937 = vadd.f32 %v129, %v936
  %v938 = vpop.f32.mrb[0].mxu0
  %v939 = vpop.f32.mrb[0].mxu0
  %v940 = vadd.f32 %v134, %v939
  %v941 = vpop.f32.mrb[0].mxu0
  %942 = vmatprep.mubr.bf16.mxu0 %v509
  %943 = vmatmul.mubr.bf16.gmra.mrb[0].mxu0 %v424
  %v944 = vpop.f32.mrb[0].mxu0
  %v945 = vadd.f32 %v139, %v944
  %v946 = vpop.f32.mrb[0].mxu0
  %v947 = vpop.f32.mrb[0].mxu0
  %v948 = vpop.f32.mrb[0].mxu0
  %949 = vdwg.mxu0
  %v950 = vmax.f32 %v905, 0.0
  %v951 = vmax.f32 %v908, 0.0
  %v952 = vmax.f32 %v913, 0.0
  %v953 = vmax.f32 %v916, 0.0
  %v954 = vmax.f32 %v921, 0.0
  %v955 = vmax.f32 %v924, 0.0
  %v956 = vmax.f32 %v929, 0.0
  %v957 = vmax.f32 %v932, 0.0
  %v958 = vmax.f32 %v937, 0.0
  %v959 = vmax.f32 %v940, 0.0
  %v960 = vmax.f32 %v945, 0.0
  %v961 = vmax.f32 %v779, %v950
  %v962 = vmax.f32 %v780, %v951
  %v963 = vmax.f32 %v781, %v952
  %v964 = vmax.f32 %v782, %v953
  %v965 = vmax.f32 %v783, %v954
  %v966 = vmax.f32 %v784, %v955
  %v967 = vmax.f32 %v785, %v956
  %v968 = vmax.f32 %v786, %v957
  %v969 = vmax.f32 %v787, %v958
  %v970 = vmax.f32 %v788, %v959
  %v971 = vmax.f32 %v789, %v960
  %v972 = vpack.c.bf16 %v962, %v961
  %v973 = vpack.c.bf16 %v964, %v963
  %v974 = vpack.c.bf16 %v966, %v965
  %v975 = vpack.c.bf16 %v968, %v967
  %v976 = vpack.c.bf16 %v970, %v969
  %v977 = vpack.c.bf16 %v971, %v971
  %v978 = vld [vmem:[%s0 + $0x78] sm:$0xf]
  %v979 = vld [vmem:[%s0 + $0x7c] sm:$0xf]
  %v980 = vld [vmem:[%s0 + $0x80] sm:$0xf]
  %v981 = vld [vmem:[%s0 + $0x84] sm:$0xf]
  %v982 = vld [vmem:[%s0 + $0x88] sm:$0xf]
  %v983 = vld [vmem:[%s0 + $0x8c] sm:$0xf]
  %v984 = vld [vmem:[%s0 + $0x90] sm:$0xf]
  %v985 = vld [vmem:[%s0 + $0x94] sm:$0xf]
  %v986 = vld [vmem:[%s0 + $0x98] sm:$0xf]
  %v987 = vld [vmem:[%s0 + $0x9c] sm:$0xf]
  %v988 = vld [vmem:[%s0 + $0xa0] sm:$0xf]
  %v989 = vld [vmem:[%s0 + $0xa4] sm:$0xf]
  %v990 = vld [vmem:[%s0 + $0xa8] sm:$0xf]
  %v991 = vld [vmem:[%s0 + $0xac] sm:$0xf]
  %v992 = vld [vmem:[%s0 + $0xb0] sm:$0xf]
  %v993 = vld [vmem:[%s0 + $0xb4] sm:$0xf]
  %v994 = vld [vmem:[%s0 + $0xb8] sm:$0xf]
  %v995 = vld [vmem:[%s0 + $0xbc] sm:$0xf]
  %v996 = vld [vmem:[%s0 + $0xc0] sm:$0xf]
  %v997 = vld [vmem:[%s0 + $0xc4] sm:$0xf]
  %v1018 = vunpack.c.l.b16 %v978
  %v1019 = vunpack.c.l.b16 %v979
  %v1020 = vunpack.c.l.b16 %v980
  %v1021 = vunpack.c.l.b16 %v981
  %v1022 = vunpack.c.l.b16 %v982
  %v1023 = vunpack.c.l.b16 %v983
  %v1024 = vunpack.c.l.b16 %v984
  %v1025 = vunpack.c.l.b16 %v985
  %v1026 = vunpack.c.l.b16 %v986
  %v1027 = vunpack.c.l.b16 %v987
  %v1028 = vunpack.c.l.b16 %v988
  %v1029 = vunpack.c.l.b16 %v989
  %v1030 = vunpack.c.l.b16 %v990
  %v1031 = vunpack.c.l.b16 %v991
  %v1032 = vunpack.c.l.b16 %v992
  %v1033 = vunpack.c.l.b16 %v993
  %v1034 = vunpack.c.l.b16 %v994
  %v1035 = vunpack.c.l.b16 %v995
  %v1036 = vunpack.c.l.b16 %v996
  %v1037 = vunpack.c.l.b16 %v997
  %v1038 = vpack.c.b16 %v1019, %v1018
  %v1039 = vpack.c.b16 %v1021, %v1020
  %v1040 = vpack.c.b16 %v1023, %v1022
  %v1041 = vpack.c.b16 %v1025, %v1024
  %v1042 = vpack.c.b16 %v1027, %v1026
  %v1043 = vpack.c.b16 %v1029, %v1028
  %v1044 = vpack.c.b16 %v1031, %v1030
  %v1045 = vpack.c.b16 %v1033, %v1032
  %v1046 = vpack.c.b16 %v1035, %v1034
  %v1047 = vpack.c.b16 %v1037, %v1036
  %1058 = vmatprep.subr.bf16.mxu0 0
  %1059 = vmatpush1.bf16.msra.mxu0 %v1038
  %1060 = vmatprep.subr.bf16.mxu0 0
  %1061 = vmatpush1.bf16.msra.mxu0 %v1039
  %1062 = vmatprep.subr.bf16.mxu0 0
  %1063 = vmatpush1.bf16.msra.mxu0 %v1040
  %1064 = vmatprep.subr.bf16.mxu0 0
  %1065 = vmatpush1.bf16.msra.mxu0 %v1041
  %1066 = vmatprep.subr.bf16.mxu0 0
  %1067 = vmatpush1.bf16.msra.mxu0 %v1042
  %1068 = vmatprep.subr.bf16.mxu0 0
  %1069 = vmatpush1.bf16.msra.mxu0 %v1043
  %1070 = vmatprep.subr.bf16.mxu0 0
  %1071 = vmatpush1.bf16.msra.mxu0 %v1044
  %1072 = vmatprep.subr.bf16.mxu0 0
  %1073 = vmatpush1.bf16.msra.mxu0 %v1045
  %1074 = vmatprep.subr.bf16.mxu0 0
  %1075 = vmatpush1.bf16.msra.mxu0 %v1046
  %1076 = vmatprep.subr.bf16.mxu0 0
  %1077 = vmatpush1.bf16.msra.mxu0 %v1047
  %1078 = vmatprep.subr.bf16.mxu0 0
  %1079 = vmatpush1.bf16.msra.mxu0 0
  %1080 = vmatprep.subr.bf16.mxu0 0
  %1081 = vmatpush1.bf16.msra.mxu0 0
  %1082 = vmatprep.subr.bf16.mxu0 0
  %1083 = vmatpush1.bf16.msra.mxu0 0
  %1084 = vmatprep.subr.bf16.mxu0 0
  %1085 = vmatpush1.bf16.msra.mxu0 0
  %1086 = vmatprep.subr.bf16.mxu0 0
  %1087 = vmatpush1.bf16.msra.mxu0 0
  %1088 = vmatprep.subr.bf16.mxu0 0
  %1089 = vmatpush1.bf16.msra.mxu0 0
  %1090 = vmatprep.mubr.bf16.mxu0 %v494
  %1091 = vmatmul.mubr.bf16.gmra.mrb[0].mxu0 %v414
  %v1092 = vpop.f32.mrb[0].mxu0
  %v1093 = vadd.f32 %v89, %v1092
  %v1094 = vpop.f32.mrb[0].mxu0
  %v1095 = vpop.f32.mrb[0].mxu0
  %v1096 = vadd.f32 %v94, %v1095
  %v1097 = vpop.f32.mrb[0].mxu0
  %1098 = vmatprep.mubr.bf16.mxu0 %v497
  %1099 = vmatmul.mubr.bf16.gmra.mrb[0].mxu0 %v416
  %v1100 = vpop.f32.mrb[0].mxu0
  %v1101 = vadd.f32 %v99, %v1100
  %v1102 = vpop.f32.mrb[0].mxu0
  %v1103 = vpop.f32.mrb[0].mxu0
  %v1104 = vadd.f32 %v104, %v1103
  %v1105 = vpop.f32.mrb[0].mxu0
  %1106 = vmatprep.mubr.bf16.mxu0 %v500
  %1107 = vmatmul.mubr.bf16.gmra.mrb[0].mxu0 %v418
  %v1108 = vpop.f32.mrb[0].mxu0
  %v1109 = vadd.f32 %v109, %v1108
  %v1110 = vpop.f32.mrb[0].mxu0
  %v1111 = vpop.f32.mrb[0].mxu0
  %v1112 = vadd.f32 %v114, %v1111
  %v1113 = vpop.f32.mrb[0].mxu0
  %1114 = vmatprep.mubr.bf16.mxu0 %v503
  %1115 = vmatmul.mubr.bf16.gmra.mrb[0].mxu0 %v420
  %v1116 = vpop.f32.mrb[0].mxu0
  %v1117 = vadd.f32 %v119, %v1116
  %v1118 = vpop.f32.mrb[0].mxu0
  %v1119 = vpop.f32.mrb[0].mxu0
  %v1120 = vadd.f32 %v124, %v1119
  %v1121 = vpop.f32.mrb[0].mxu0
  %1122 = vmatprep.mubr.bf16.mxu0 %v506
  %1123 = vmatmul.mubr.bf16.gmra.mrb[0].mxu0 %v422
  %v1124 = vpop.f32.mrb[0].mxu0
  %v1125 = vadd.f32 %v129, %v1124
  %v1126 = vpop.f32.mrb[0].mxu0
  %v1127 = vpop.f32.mrb[0].mxu0
  %v1128 = vadd.f32 %v134, %v1127
  %v1129 = vpop.f32.mrb[0].mxu0
  %1130 = vmatprep.mubr.bf16.mxu0 %v509
  %1131 = vmatmul.mubr.bf16.gmra.mrb[0].mxu0 %v424
  %v1132 = vpop.f32.mrb[0].mxu0
  %v1133 = vadd.f32 %v139, %v1132
  %v1134 = vpop.f32.mrb[0].mxu0
  %v1135 = vpop.f32.mrb[0].mxu0
  %v1136 = vpop.f32.mrb[0].mxu0
  %1137 = vdwg.mxu0
  %v1138 = vmax.f32 %v1093, 0.0
  %v1139 = vmax.f32 %v1096, 0.0
  %v1140 = vmax.f32 %v1101, 0.0
  %v1141 = vmax.f32 %v1104, 0.0
  %v1142 = vmax.f32 %v1109, 0.0
  %v1143 = vmax.f32 %v1112, 0.0
  %v1144 = vmax.f32 %v1117, 0.0
  %v1145 = vmax.f32 %v1120, 0.0
  %v1146 = vmax.f32 %v1125, 0.0
  %v1147 = vmax.f32 %v1128, 0.0
  %v1148 = vmax.f32 %v1133, 0.0
  %v1149 = vld [vmem:[%s0 + $0xa0] sm:$0xf]
  %v1150 = vld [vmem:[%s0 + $0xa4] sm:$0xf]
  %v1151 = vld [vmem:[%s0 + $0xa8] sm:$0xf]
  %v1152 = vld [vmem:[%s0 + $0xac] sm:$0xf]
  %v1153 = vld [vmem:[%s0 + $0xb0] sm:$0xf]
  %v1154 = vld [vmem:[%s0 + $0xb4] sm:$0xf]
  %v1155 = vld [vmem:[%s0 + $0xb8] sm:$0xf]
  %v1156 = vld [vmem:[%s0 + $0xbc] sm:$0xf]
  %v1157 = vld [vmem:[%s0 + $0xc0] sm:$0xf]
  %v1158 = vld [vmem:[%s0 + $0xc4] sm:$0xf]
  %v1159 = vld [vmem:[%s0 + $0xc8] sm:$0xf]
  %v1160 = vld [vmem:[%s0 + $0xcc] sm:$0xf]
  %v1161 = vld [vmem:[%s0 + $0xd0] sm:$0xf]
  %v1162 = vld [vmem:[%s0 + $0xd4] sm:$0xf]
  %v1163 = vld [vmem:[%s0 + $0xd8] sm:$0xf]
  %v1164 = vld [vmem:[%s0 + $0xdc] sm:$0xf]
  %v1165 = vld [vmem:[%s0 + $0xe0] sm:$0xf]
  %v1166 = vld [vmem:[%s0 + $0xe4] sm:$0xf]
  %v1167 = vld [vmem:[%s0 + $0xe8] sm:$0xf]
  %v1168 = vld [vmem:[%s0 + $0xec] sm:$0xf]
  %v1189 = vunpack.c.l.b16 %v1149
  %v1190 = vunpack.c.l.b16 %v1150
  %v1191 = vunpack.c.l.b16 %v1151
  %v1192 = vunpack.c.l.b16 %v1152
  %v1193 = vunpack.c.l.b16 %v1153
  %v1194 = vunpack.c.l.b16 %v1154
  %v1195 = vunpack.c.l.b16 %v1155
  %v1196 = vunpack.c.l.b16 %v1156
  %v1197 = vunpack.c.l.b16 %v1157
  %v1198 = vunpack.c.l.b16 %v1158
  %v1199 = vunpack.c.l.b16 %v1159
  %v1200 = vunpack.c.l.b16 %v1160
  %v1201 = vunpack.c.l.b16 %v1161
  %v1202 = vunpack.c.l.b16 %v1162
  %v1203 = vunpack.c.l.b16 %v1163
  %v1204 = vunpack.c.l.b16 %v1164
  %v1205 = vunpack.c.l.b16 %v1165
  %v1206 = vunpack.c.l.b16 %v1166
  %v1207 = vunpack.c.l.b16 %v1167
  %v1208 = vunpack.c.l.b16 %v1168
  %v1209 = vpack.c.b16 %v1190, %v1189
  %v1210 = vpack.c.b16 %v1192, %v1191
  %v1211 = vpack.c.b16 %v1194, %v1193
  %v1212 = vpack.c.b16 %v1196, %v1195
  %v1213 = vpack.c.b16 %v1198, %v1197
  %v1214 = vpack.c.b16 %v1200, %v1199
  %v1215 = vpack.c.b16 %v1202, %v1201
  %v1216 = vpack.c.b16 %v1204, %v1203
  %v1217 = vpack.c.b16 %v1206, %v1205
  %v1218 = vpack.c.b16 %v1208, %v1207
  %1229 = vmatprep.subr.bf16.mxu0 0
  %1230 = vmatpush1.bf16.msra.mxu0 %v1209
  %1231 = vmatprep.subr.bf16.mxu0 0
  %1232 = vmatpush1.bf16.msra.mxu0 %v1210
  %1233 = vmatprep.subr.bf16.mxu0 0
  %1234 = vmatpush1.bf16.msra.mxu0 %v1211
  %1235 = vmatprep.subr.bf16.mxu0 0
  %1236 = vmatpush1.bf16.msra.mxu0 %v1212
  %1237 = vmatprep.subr.bf16.mxu0 0
  %1238 = vmatpush1.bf16.msra.mxu0 %v1213
  %1239 = vmatprep.subr.bf16.mxu0 0
  %1240 = vmatpush1.bf16.msra.mxu0 %v1214
  %1241 = vmatprep.subr.bf16.mxu0 0
  %1242 = vmatpush1.bf16.msra.mxu0 %v1215
  %1243 = vmatprep.subr.bf16.mxu0 0
  %1244 = vmatpush1.bf16.msra.mxu0 %v1216
  %1245 = vmatprep.subr.bf16.mxu0 0
  %1246 = vmatpush1.bf16.msra.mxu0 %v1217
  %1247 = vmatprep.subr.bf16.mxu0 0
  %1248 = vmatpush1.bf16.msra.mxu0 %v1218
  %1249 = vmatprep.subr.bf16.mxu0 0
  %1250 = vmatpush1.bf16.msra.mxu0 0
  %1251 = vmatprep.subr.bf16.mxu0 0
  %1252 = vmatpush1.bf16.msra.mxu0 0
  %1253 = vmatprep.subr.bf16.mxu0 0
  %1254 = vmatpush1.bf16.msra.mxu0 0
  %1255 = vmatprep.subr.bf16.mxu0 0
  %1256 = vmatpush1.bf16.msra.mxu0 0
  %1257 = vmatprep.subr.bf16.mxu0 0
  %1258 = vmatpush1.bf16.msra.mxu0 0
  %1259 = vmatprep.subr.bf16.mxu0 0
  %1260 = vmatpush1.bf16.msra.mxu0 0
  %1261 = vmatprep.mubr.bf16.mxu0 %v494
  %1262 = vmatmul.mubr.bf16.gmra.mrb[0].mxu0 %v414
  %v1263 = vpop.f32.mrb[0].mxu0
  %v1264 = vadd.f32 %v89, %v1263
  %v1265 = vpop.f32.mrb[0].mxu0
  %v1266 = vpop.f32.mrb[0].mxu0
  %v1267 = vadd.f32 %v94, %v1266
  %v1268 = vpop.f32.mrb[0].mxu0
  %1269 = vmatprep.mubr.bf16.mxu0 %v497
  %1270 = vmatmul.mubr.bf16.gmra.mrb[0].mxu0 %v416
  %v1271 = vpop.f32.mrb[0].mxu0
  %v1272 = vadd.f32 %v99, %v1271
  %v1273 = vpop.f32.mrb[0].mxu0
  %v1274 = vpop.f32.mrb[0].mxu0
  %v1275 = vadd.f32 %v104, %v1274
  %v1276 = vpop.f32.mrb[0].mxu0
  %1277 = vmatprep.mubr.bf16.mxu0 %v500
  %1278 = vmatmul.mubr.bf16.gmra.mrb[0].mxu0 %v418
  %v1279 = vpop.f32.mrb[0].mxu0
  %v1280 = vadd.f32 %v109, %v1279
  %v1281 = vpop.f32.mrb[0].mxu0
  %v1282 = vpop.f32.mrb[0].mxu0
  %v1283 = vadd.f32 %v114, %v1282
  %v1284 = vpop.f32.mrb[0].mxu0
  %1285 = vmatprep.mubr.bf16.mxu0 %v503
  %1286 = vmatmul.mubr.bf16.gmra.mrb[0].mxu0 %v420
  %v1287 = vpop.f32.mrb[0].mxu0
  %v1288 = vadd.f32 %v119, %v1287
  %v1289 = vpop.f32.mrb[0].mxu0
  %v1290 = vpop.f32.mrb[0].mxu0
  %v1291 = vadd.f32 %v124, %v1290
  %v1292 = vpop.f32.mrb[0].mxu0
  %1293 = vmatprep.mubr.bf16.mxu0 %v506
  %1294 = vmatmul.mubr.bf16.gmra.mrb[0].mxu0 %v422
  %v1295 = vpop.f32.mrb[0].mxu0
  %v1296 = vadd.f32 %v129, %v1295
  %v1297 = vpop.f32.mrb[0].mxu0
  %v1298 = vpop.f32.mrb[0].mxu0
  %v1299 = vadd.f32 %v134, %v1298
  %v1300 = vpop.f32.mrb[0].mxu0
  %1301 = vmatprep.mubr.bf16.mxu0 %v509
  %1302 = vmatmul.mubr.bf16.gmra.mrb[0].mxu0 %v424
  %v1303 = vpop.f32.mrb[0].mxu0
  %v1304 = vadd.f32 %v139, %v1303
  %v1305 = vpop.f32.mrb[0].mxu0
  %v1306 = vpop.f32.mrb[0].mxu0
  %v1307 = vpop.f32.mrb[0].mxu0
  %1308 = vdwg.mxu0
  %v1309 = vmax.f32 %v1264, 0.0
  %v1310 = vmax.f32 %v1267, 0.0
  %v1311 = vmax.f32 %v1272, 0.0
  %v1312 = vmax.f32 %v1275, 0.0
  %v1313 = vmax.f32 %v1280, 0.0
  %v1314 = vmax.f32 %v1283, 0.0
  %v1315 = vmax.f32 %v1288, 0.0
  %v1316 = vmax.f32 %v1291, 0.0
  %v1317 = vmax.f32 %v1296, 0.0
  %v1318 = vmax.f32 %v1299, 0.0
  %v1319 = vmax.f32 %v1304, 0.0
  %v1320 = vmax.f32 %v1138, %v1309
  %v1321 = vmax.f32 %v1139, %v1310
  %v1322 = vmax.f32 %v1140, %v1311
  %v1323 = vmax.f32 %v1141, %v1312
  %v1324 = vmax.f32 %v1142, %v1313
  %v1325 = vmax.f32 %v1143, %v1314
  %v1326 = vmax.f32 %v1144, %v1315
  %v1327 = vmax.f32 %v1145, %v1316
  %v1328 = vmax.f32 %v1146, %v1317
  %v1329 = vmax.f32 %v1147, %v1318
  %v1330 = vmax.f32 %v1148, %v1319
  %v1331 = vpack.c.bf16 %v1321, %v1320
  %v1332 = vpack.c.bf16 %v1323, %v1322
  %v1333 = vpack.c.bf16 %v1325, %v1324
  %v1334 = vpack.c.bf16 %v1327, %v1326
  %v1335 = vpack.c.bf16 %v1329, %v1328
  %v1336 = vpack.c.bf16 %v1330, %v1330
  %v1337 = vld [vmem:[%s0 + $0xc8] sm:$0xf]
  %v1338 = vld [vmem:[%s0 + $0xcc] sm:$0xf]
  %v1339 = vld [vmem:[%s0 + $0xd0] sm:$0xf]
  %v1340 = vld [vmem:[%s0 + $0xd4] sm:$0xf]
  %v1341 = vld [vmem:[%s0 + $0xd8] sm:$0xf]
  %v1342 = vld [vmem:[%s0 + $0xdc] sm:$0xf]
  %v1343 = vld [vmem:[%s0 + $0xe0] sm:$0xf]
  %v1344 = vld [vmem:[%s0 + $0xe4] sm:$0xf]
  %v1345 = vld [vmem:[%s0 + $0xe8] sm:$0xf]
  %v1346 = vld [vmem:[%s0 + $0xec] sm:$0xf]
  %v1347 = vld [vmem:[%s0 + $0xf0] sm:$0xf]
  %v1348 = vld [vmem:[%s0 + $0xf4] sm:$0xf]
  %v1349 = vld [vmem:[%s0 + $0xf8] sm:$0xf]
  %v1350 = vld [vmem:[%s0 + $0xfc] sm:$0xf]
  %v1351 = vld [vmem:[%s0 + $0x100] sm:$0xf]
  %v1352 = vld [vmem:[%s0 + $0x104] sm:$0xf]
  %v1353 = vld [vmem:[%s0 + $0x108] sm:$0xf]
  %v1354 = vld [vmem:[%s0 + $0x10c] sm:$0xf]
  %v1355 = vld [vmem:[%s0 + $0x110] sm:$0xf]
  %v1356 = vld [vmem:[%s0 + $0x114] sm:$0xf]
  %v1377 = vunpack.c.l.b16 %v1337
  %v1378 = vunpack.c.l.b16 %v1338
  %v1379 = vunpack.c.l.b16 %v1339
  %v1380 = vunpack.c.l.b16 %v1340
  %v1381 = vunpack.c.l.b16 %v1341
  %v1382 = vunpack.c.l.b16 %v1342
  %v1383 = vunpack.c.l.b16 %v1343
  %v1384 = vunpack.c.l.b16 %v1344
  %v1385 = vunpack.c.l.b16 %v1345
  %v1386 = vunpack.c.l.b16 %v1346
  %v1387 = vunpack.c.l.b16 %v1347
  %v1388 = vunpack.c.l.b16 %v1348
  %v1389 = vunpack.c.l.b16 %v1349
  %v1390 = vunpack.c.l.b16 %v1350
  %v1391 = vunpack.c.l.b16 %v1351
  %v1392 = vunpack.c.l.b16 %v1352
  %v1393 = vunpack.c.l.b16 %v1353
  %v1394 = vunpack.c.l.b16 %v1354
  %v1395 = vunpack.c.l.b16 %v1355
  %v1396 = vunpack.c.l.b16 %v1356
  %v1397 = vpack.c.b16 %v1378, %v1377
  %v1398 = vpack.c.b16 %v1380, %v1379
  %v1399 = vpack.c.b16 %v1382, %v1381
  %v1400 = vpack.c.b16 %v1384, %v1383
  %v1401 = vpack.c.b16 %v1386, %v1385
  %v1402 = vpack.c.b16 %v1388, %v1387
  %v1403 = vpack.c.b16 %v1390, %v1389
  %v1404 = vpack.c.b16 %v1392, %v1391
  %v1405 = vpack.c.b16 %v1394, %v1393
  %v1406 = vpack.c.b16 %v1396, %v1395
  %1417 = vmatprep.subr.bf16.mxu0 0
  %1418 = vmatpush1.bf16.msra.mxu0 %v1397
  %1419 = vmatprep.subr.bf16.mxu0 0
  %1420 = vmatpush1.bf16.msra.mxu0 %v1398
  %1421 = vmatprep.subr.bf16.mxu0 0
  %1422 = vmatpush1.bf16.msra.mxu0 %v1399
  %1423 = vmatprep.subr.bf16.mxu0 0
  %1424 = vmatpush1.bf16.msra.mxu0 %v1400
  %1425 = vmatprep.subr.bf16.mxu0 0
  %1426 = vmatpush1.bf16.msra.mxu0 %v1401
  %1427 = vmatprep.subr.bf16.mxu0 0
  %1428 = vmatpush1.bf16.msra.mxu0 %v1402
  %1429 = vmatprep.subr.bf16.mxu0 0
  %1430 = vmatpush1.bf16.msra.mxu0 %v1403
  %1431 = vmatprep.subr.bf16.mxu0 0
  %1432 = vmatpush1.bf16.msra.mxu0 %v1404
  %1433 = vmatprep.subr.bf16.mxu0 0
  %1434 = vmatpush1.bf16.msra.mxu0 %v1405
  %1435 = vmatprep.subr.bf16.mxu0 0
  %1436 = vmatpush1.bf16.msra.mxu0 %v1406
  %1437 = vmatprep.subr.bf16.mxu0 0
  %1438 = vmatpush1.bf16.msra.mxu0 0
  %1439 = vmatprep.subr.bf16.mxu0 0
  %1440 = vmatpush1.bf16.msra.mxu0 0
  %1441 = vmatprep.subr.bf16.mxu0 0
  %1442 = vmatpush1.bf16.msra.mxu0 0
  %1443 = vmatprep.subr.bf16.mxu0 0
  %1444 = vmatpush1.bf16.msra.mxu0 0
  %1445 = vmatprep.subr.bf16.mxu0 0
  %1446 = vmatpush1.bf16.msra.mxu0 0
  %1447 = vmatprep.subr.bf16.mxu0 0
  %1448 = vmatpush1.bf16.msra.mxu0 0
  %1449 = vmatprep.mubr.bf16.mxu0 %v494
  %1450 = vmatmul.mubr.bf16.gmra.mrb[0].mxu0 %v414
  %v1451 = vpop.f32.mrb[0].mxu0
  %v1452 = vadd.f32 %v89, %v1451
  %v1453 = vpop.f32.mrb[0].mxu0
  %v1454 = vpop.f32.mrb[0].mxu0
  %v1455 = vadd.f32 %v94, %v1454
  %v1456 = vpop.f32.mrb[0].mxu0
  %1457 = vmatprep.mubr.bf16.mxu0 %v497
  %1458 = vmatmul.mubr.bf16.gmra.mrb[0].mxu0 %v416
  %v1459 = vpop.f32.mrb[0].mxu0
  %v1460 = vadd.f32 %v99, %v1459
  %v1461 = vpop.f32.mrb[0].mxu0
  %v1462 = vpop.f32.mrb[0].mxu0
  %v1463 = vadd.f32 %v104, %v1462
  %v1464 = vpop.f32.mrb[0].mxu0
  %1465 = vmatprep.mubr.bf16.mxu0 %v500
  %1466 = vmatmul.mubr.bf16.gmra.mrb[0].mxu0 %v418
  %v1467 = vpop.f32.mrb[0].mxu0
  %v1468 = vadd.f32 %v109, %v1467
  %v1469 = vpop.f32.mrb[0].mxu0
  %v1470 = vpop.f32.mrb[0].mxu0
  %v1471 = vadd.f32 %v114, %v1470
  %v1472 = vpop.f32.mrb[0].mxu0
  %1473 = vmatprep.mubr.bf16.mxu0 %v503
  %1474 = vmatmul.mubr.bf16.gmra.mrb[0].mxu0 %v420
  %v1475 = vpop.f32.mrb[0].mxu0
  %v1476 = vadd.f32 %v119, %v1475
  %v1477 = vpop.f32.mrb[0].mxu0
  %v1478 = vpop.f32.mrb[0].mxu0
  %v1479 = vadd.f32 %v124, %v1478
  %v1480 = vpop.f32.mrb[0].mxu0
  %1481 = vmatprep.mubr.bf16.mxu0 %v506
  %1482 = vmatmul.mubr.bf16.gmra.mrb[0].mxu0 %v422
  %v1483 = vpop.f32.mrb[0].mxu0
  %v1484 = vadd.f32 %v129, %v1483
  %v1485 = vpop.f32.mrb[0].mxu0
  %v1486 = vpop.f32.mrb[0].mxu0
  %v1487 = vadd.f32 %v134, %v1486
  %v1488 = vpop.f32.mrb[0].mxu0
  %1489 = vmatprep.mubr.bf16.mxu0 %v509
  %1490 = vmatmul.mubr.bf16.gmra.mrb[0].mxu0 %v424
  %v1491 = vpop.f32.mrb[0].mxu0
  %v1492 = vadd.f32 %v139, %v1491
  %v1493 = vpop.f32.mrb[0].mxu0
  %v1494 = vpop.f32.mrb[0].mxu0
  %v1495 = vpop.f32.mrb[0].mxu0
  %1496 = vdwg.mxu0
  %v1497 = vmax.f32 %v1452, 0.0
  %v1498 = vmax.f32 %v1455, 0.0
  %v1499 = vmax.f32 %v1460, 0.0
  %v1500 = vmax.f32 %v1463, 0.0
  %v1501 = vmax.f32 %v1468, 0.0
  %v1502 = vmax.f32 %v1471, 0.0
  %v1503 = vmax.f32 %v1476, 0.0
  %v1504 = vmax.f32 %v1479, 0.0
  %v1505 = vmax.f32 %v1484, 0.0
  %v1506 = vmax.f32 %v1487, 0.0
  %v1507 = vmax.f32 %v1492, 0.0
  %v1508 = vld [vmem:[%s0 + $0xf0] sm:$0xf]
  %v1509 = vld [vmem:[%s0 + $0xf4] sm:$0xf]
  %v1510 = vld [vmem:[%s0 + $0xf8] sm:$0xf]
  %v1511 = vld [vmem:[%s0 + $0xfc] sm:$0xf]
  %v1512 = vld [vmem:[%s0 + $0x100] sm:$0xf]
  %v1513 = vld [vmem:[%s0 + $0x104] sm:$0xf]
  %v1514 = vld [vmem:[%s0 + $0x108] sm:$0xf]
  %v1515 = vld [vmem:[%s0 + $0x10c] sm:$0xf]
  %v1516 = vld [vmem:[%s0 + $0x110] sm:$0xf]
  %v1517 = vld [vmem:[%s0 + $0x114] sm:$0xf]
  %v1518 = vld [vmem:[%s0 + $0x118] sm:$0xf]
  %v1519 = vld [vmem:[%s0 + $0x11c] sm:$0xf]
  %v1520 = vld [vmem:[%s0 + $0x120] sm:$0xf]
  %v1521 = vld [vmem:[%s0 + $0x124] sm:$0xf]
  %v1522 = vld [vmem:[%s0 + $0x128] sm:$0xf]
  %v1523 = vld [vmem:[%s0 + $0x12c] sm:$0xf]
  %v1524 = vld [vmem:[%s0 + $0x130] sm:$0xf]
  %v1525 = vld [vmem:[%s0 + $0x134] sm:$0xf]
  %v1526 = vld [vmem:[%s0 + $0x138] sm:$0xf]
  %v1527 = vld [vmem:[%s0 + $0x13c] sm:$0xf]
  %v1548 = vunpack.c.l.b16 %v1508
  %v1549 = vunpack.c.l.b16 %v1509
  %v1550 = vunpack.c.l.b16 %v1510
  %v1551 = vunpack.c.l.b16 %v1511
  %v1552 = vunpack.c.l.b16 %v1512
  %v1553 = vunpack.c.l.b16 %v1513
  %v1554 = vunpack.c.l.b16 %v1514
  %v1555 = vunpack.c.l.b16 %v1515
  %v1556 = vunpack.c.l.b16 %v1516
  %v1557 = vunpack.c.l.b16 %v1517
  %v1558 = vunpack.c.l.b16 %v1518
  %v1559 = vunpack.c.l.b16 %v1519
  %v1560 = vunpack.c.l.b16 %v1520
  %v1561 = vunpack.c.l.b16 %v1521
  %v1562 = vunpack.c.l.b16 %v1522
  %v1563 = vunpack.c.l.b16 %v1523
  %v1564 = vunpack.c.l.b16 %v1524
  %v1565 = vunpack.c.l.b16 %v1525
  %v1566 = vunpack.c.l.b16 %v1526
  %v1567 = vunpack.c.l.b16 %v1527
  %v1568 = vpack.c.b16 %v1549, %v1548
  %v1569 = vpack.c.b16 %v1551, %v1550
  %v1570 = vpack.c.b16 %v1553, %v1552
  %v1571 = vpack.c.b16 %v1555, %v1554
  %v1572 = vpack.c.b16 %v1557, %v1556
  %v1573 = vpack.c.b16 %v1559, %v1558
  %v1574 = vpack.c.b16 %v1561, %v1560
  %v1575 = vpack.c.b16 %v1563, %v1562
  %v1576 = vpack.c.b16 %v1565, %v1564
  %v1577 = vpack.c.b16 %v1567, %v1566
  %1588 = vmatprep.subr.bf16.mxu0 0
  %1589 = vmatpush1.bf16.msra.mxu0 %v1568
  %1590 = vmatprep.subr.bf16.mxu0 0
  %1591 = vmatpush1.bf16.msra.mxu0 %v1569
  %1592 = vmatprep.subr.bf16.mxu0 0
  %1593 = vmatpush1.bf16.msra.mxu0 %v1570
  %1594 = vmatprep.subr.bf16.mxu0 0
  %1595 = vmatpush1.bf16.msra.mxu0 %v1571
  %1596 = vmatprep.subr.bf16.mxu0 0
  %1597 = vmatpush1.bf16.msra.mxu0 %v1572
  %1598 = vmatprep.subr.bf16.mxu0 0
  %1599 = vmatpush1.bf16.msra.mxu0 %v1573
  %1600 = vmatprep.subr.bf16.mxu0 0
  %1601 = vmatpush1.bf16.msra.mxu0 %v1574
  %1602 = vmatprep.subr.bf16.mxu0 0
  %1603 = vmatpush1.bf16.msra.mxu0 %v1575
  %1604 = vmatprep.subr.bf16.mxu0 0
  %1605 = vmatpush1.bf16.msra.mxu0 %v1576
  %1606 = vmatprep.subr.bf16.mxu0 0
  %1607 = vmatpush1.bf16.msra.mxu0 %v1577
  %1608 = vmatprep.subr.bf16.mxu0 0
  %1609 = vmatpush1.bf16.msra.mxu0 0
  %1610 = vmatprep.subr.bf16.mxu0 0
  %1611 = vmatpush1.bf16.msra.mxu0 0
  %1612 = vmatprep.subr.bf16.mxu0 0
  %1613 = vmatpush1.bf16.msra.mxu0 0
  %1614 = vmatprep.subr.bf16.mxu0 0
  %1615 = vmatpush1.bf16.msra.mxu0 0
  %1616 = vmatprep.subr.bf16.mxu0 0
  %1617 = vmatpush1.bf16.msra.mxu0 0
  %1618 = vmatprep.subr.bf16.mxu0 0
  %1619 = vmatpush1.bf16.msra.mxu0 0
  %1620 = vmatprep.mubr.bf16.mxu0 %v494
  %1621 = vmatmul.mubr.bf16.gmra.mrb[0].mxu0 %v414
  %v1622 = vpop.f32.mrb[0].mxu0
  %v1623 = vadd.f32 %v89, %v1622
  %v1624 = vpop.f32.mrb[0].mxu0
  %v1625 = vpop.f32.mrb[0].mxu0
  %v1626 = vadd.f32 %v94, %v1625
  %v1627 = vpop.f32.mrb[0].mxu0
  %1628 = vmatprep.mubr.bf16.mxu0 %v497
  %1629 = vmatmul.mubr.bf16.gmra.mrb[0].mxu0 %v416
  %v1630 = vpop.f32.mrb[0].mxu0
  %v1631 = vadd.f32 %v99, %v1630
  %v1632 = vpop.f32.mrb[0].mxu0
  %v1633 = vpop.f32.mrb[0].mxu0
  %v1634 = vadd.f32 %v104, %v1633
  %v1635 = vpop.f32.mrb[0].mxu0
  %1636 = vmatprep.mubr.bf16.mxu0 %v500
  %1637 = vmatmul.mubr.bf16.gmra.mrb[0].mxu0 %v418
  %v1638 = vpop.f32.mrb[0].mxu0
  %v1639 = vadd.f32 %v109, %v1638
  %v1640 = vpop.f32.mrb[0].mxu0
  %v1641 = vpop.f32.mrb[0].mxu0
  %v1642 = vadd.f32 %v114, %v1641
  %v1643 = vpop.f32.mrb[0].mxu0
  %1644 = vmatprep.mubr.bf16.mxu0 %v503
  %1645 = vmatmul.mubr.bf16.gmra.mrb[0].mxu0 %v420
  %v1646 = vpop.f32.mrb[0].mxu0
  %v1647 = vadd.f32 %v119, %v1646
  %v1648 = vpop.f32.mrb[0].mxu0
  %v1649 = vpop.f32.mrb[0].mxu0
  %v1650 = vadd.f32 %v124, %v1649
  %v1651 = vpop.f32.mrb[0].mxu0
  %1652 = vmatprep.mubr.bf16.mxu0 %v506
  %1653 = vmatmul.mubr.bf16.gmra.mrb[0].mxu0 %v422
  %v1654 = vpop.f32.mrb[0].mxu0
  %v1655 = vadd.f32 %v129, %v1654
  %v1656 = vpop.f32.mrb[0].mxu0
  %v1657 = vpop.f32.mrb[0].mxu0
  %v1658 = vadd.f32 %v134, %v1657
  %v1659 = vpop.f32.mrb[0].mxu0
  %1660 = vmatprep.mubr.bf16.mxu0 %v509
  %1661 = vmatmul.mubr.bf16.gmra.mrb[0].mxu0 %v424
  %v1662 = vpop.f32.mrb[0].mxu0
  %v1663 = vadd.f32 %v139, %v1662
  %v1664 = vpop.f32.mrb[0].mxu0
  %v1665 = vpop.f32.mrb[0].mxu0
  %v1666 = vpop.f32.mrb[0].mxu0
  %1667 = vdwg.mxu0
  %v1668 = vmax.f32 %v1623, 0.0
  %v1669 = vmax.f32 %v1626, 0.0
  %v1670 = vmax.f32 %v1631, 0.0
  %v1671 = vmax.f32 %v1634, 0.0
  %v1672 = vmax.f32 %v1639, 0.0
  %v1673 = vmax.f32 %v1642, 0.0
  %v1674 = vmax.f32 %v1647, 0.0
  %v1675 = vmax.f32 %v1650, 0.0
  %v1676 = vmax.f32 %v1655, 0.0
  %v1677 = vmax.f32 %v1658, 0.0
  %v1678 = vmax.f32 %v1663, 0.0
  %v1679 = vmax.f32 %v1497, %v1668
  %v1680 = vmax.f32 %v1498, %v1669
  %v1681 = vmax.f32 %v1499, %v1670
  %v1682 = vmax.f32 %v1500, %v1671
  %v1683 = vmax.f32 %v1501, %v1672
  %v1684 = vmax.f32 %v1502, %v1673
  %v1685 = vmax.f32 %v1503, %v1674
  %v1686 = vmax.f32 %v1504, %v1675
  %v1687 = vmax.f32 %v1505, %v1676
  %v1688 = vmax.f32 %v1506, %v1677
  %v1689 = vmax.f32 %v1507, %v1678
  %v1690 = vpack.c.bf16 %v1680, %v1679
  %v1691 = vpack.c.bf16 %v1682, %v1681
  %v1692 = vpack.c.bf16 %v1684, %v1683
  %v1693 = vpack.c.bf16 %v1686, %v1685
  %v1694 = vpack.c.bf16 %v1688, %v1687
  %v1695 = vpack.c.bf16 %v1689, %v1689
  %v1700 = vunpack.c.l.b16 %v63
  %v1701 = vunpack.c.l.b16 %v64
  %v1702 = vunpack.c.l.b16 %v65
  %v1703 = vunpack.c.l.b16 %v66
  %v1704 = vpack.c.b16 %v1701, %v1700
  %v1705 = vpack.c.b16 %v1703, %v1702
  %vm1706 = vcmask 662528
  %v1708 = vsel %vm1706, %v1704, 0
  %v1711 = vsel %vm1706, %v1705, 0
  %vm1713 = vcmask 1040384
  %v1714 = vsel 0, 4294967295, 65535
  %v1715 = vsel %vm1713, %v1714, 0
  %v1717 = vand.u32 %v618, %v1715
  %1719 = vmatprep.subr.bf16.mxu0 0
  %1720 = vmatpush1.bf16.msra.mxu0 %v613
  %1721 = vmatprep.subr.bf16.mxu0 0
  %1722 = vmatpush1.bf16.msra.mxu0 %v614
  %1723 = vmatprep.subr.bf16.mxu0 0
  %1724 = vmatpush1.bf16.msra.mxu0 %v615
  %1725 = vmatprep.subr.bf16.mxu0 0
  %1726 = vmatpush1.bf16.msra.mxu0 %v616
  %1727 = vmatprep.subr.bf16.mxu0 0
  %1728 = vmatpush1.bf16.msra.mxu0 %v617
  %1729 = vmatprep.subr.bf16.mxu0 0
  %1730 = vmatpush1.bf16.msra.mxu0 %v1717
  %1731 = vmatprep.subr.bf16.mxu0 0
  %1732 = vmatpush1.bf16.msra.mxu0 0
  %1733 = vmatprep.subr.bf16.mxu0 0
  %1734 = vmatpush1.bf16.msra.mxu0 0
  %1735 = vmatprep.subr.bf16.mxu0 0
  %1736 = vmatpush1.bf16.msra.mxu0 0
  %1737 = vmatprep.subr.bf16.mxu0 0
  %1738 = vmatpush1.bf16.msra.mxu0 0
  %1739 = vmatprep.subr.bf16.mxu0 0
  %1740 = vmatpush1.bf16.msra.mxu0 0
  %1741 = vmatprep.subr.bf16.mxu0 0
  %1742 = vmatpush1.bf16.msra.mxu0 0
  %1743 = vmatprep.subr.bf16.mxu0 0
  %1744 = vmatpush1.bf16.msra.mxu0 0
  %1745 = vmatprep.subr.bf16.mxu0 0
  %1746 = vmatpush1.bf16.msra.mxu0 0
  %1747 = vmatprep.subr.bf16.mxu0 0
  %1748 = vmatpush1.bf16.msra.mxu0 0
  %1749 = vmatprep.subr.bf16.mxu0 0
  %1750 = vmatpush1.bf16.msra.mxu0 0
  %1751 = vmatprep.mubr.bf16.mxu0 0
  %1752 = vmatmul.mubr.bf16.gmra.mrb[0].mxu0 %v1708
  %v1753 = vpop.f32.mrb[0].mxu0
  %v1754 = vadd.f32 %v148, %v1753
  %v1755 = vpop.f32.mrb[0].mxu0
  %v1756 = vpop.f32.mrb[0].mxu0
  %v1757 = vadd.f32 %v153, %v1756
  %v1758 = vpop.f32.mrb[0].mxu0
  %1759 = vmatprep.mubr.bf16.mxu0 0
  %1760 = vmatmul.mubr.bf16.gmra.mrb[0].mxu0 %v1711
  %v1761 = vpop.f32.mrb[0].mxu0
  %v1762 = vadd.f32 %v158, %v1761
  %v1763 = vpop.f32.mrb[0].mxu0
  %v1764 = vpop.f32.mrb[0].mxu0
  %v1765 = vadd.f32 %v163, %v1764
  %v1766 = vpop.f32.mrb[0].mxu0
  %1767 = vdwg.mxu0
  %v1768 = vmax.f32 %v1754, 0.0
  %v1769 = vmax.f32 %v1757, 0.0
  %v1770 = vmax.f32 %v1762, 0.0
  %v1771 = vmax.f32 %v1765, 0.0
  %v1773 = vand.u32 %v1336, %v1715
  %1775 = vmatprep.subr.bf16.mxu0 0
  %1776 = vmatpush1.bf16.msra.mxu0 %v1331
  %1777 = vmatprep.subr.bf16.mxu0 0
  %1778 = vmatpush1.bf16.msra.mxu0 %v1332
  %1779 = vmatprep.subr.bf16.mxu0 0
  %1780 = vmatpush1.bf16.msra.mxu0 %v1333
  %1781 = vmatprep.subr.bf16.mxu0 0
  %1782 = vmatpush1.bf16.msra.mxu0 %v1334
  %1783 = vmatprep.subr.bf16.mxu0 0
  %1784 = vmatpush1.bf16.msra.mxu0 %v1335
  %1785 = vmatprep.subr.bf16.mxu0 0
  %1786 = vmatpush1.bf16.msra.mxu0 %v1773
  %1787 = vmatprep.subr.bf16.mxu0 0
  %1788 = vmatpush1.bf16.msra.mxu0 0
  %1789 = vmatprep.subr.bf16.mxu0 0
  %1790 = vmatpush1.bf16.msra.mxu0 0
  %1791 = vmatprep.subr.bf16.mxu0 0
  %1792 = vmatpush1.bf16.msra.mxu0 0
  %1793 = vmatprep.subr.bf16.mxu0 0
  %1794 = vmatpush1.bf16.msra.mxu0 0
  %1795 = vmatprep.subr.bf16.mxu0 0
  %1796 = vmatpush1.bf16.msra.mxu0 0
  %1797 = vmatprep.subr.bf16.mxu0 0
  %1798 = vmatpush1.bf16.msra.mxu0 0
  %1799 = vmatprep.subr.bf16.mxu0 0
  %1800 = vmatpush1.bf16.msra.mxu0 0
  %1801 = vmatprep.subr.bf16.mxu0 0
  %1802 = vmatpush1.bf16.msra.mxu0 0
  %1803 = vmatprep.subr.bf16.mxu0 0
  %1804 = vmatpush1.bf16.msra.mxu0 0
  %1805 = vmatprep.subr.bf16.mxu0 0
  %1806 = vmatpush1.bf16.msra.mxu0 0
  %1807 = vmatprep.mubr.bf16.mxu0 0
  %1808 = vmatmul.mubr.bf16.gmra.mrb[0].mxu0 %v1708
  %v1809 = vpop.f32.mrb[0].mxu0
  %v1810 = vadd.f32 0.0, %v1809
  %v1811 = vpop.f32.mrb[0].mxu0
  %v1812 = vpop.f32.mrb[0].mxu0
  %v1813 = vadd.f32 0.0, %v1812
  %v1814 = vpop.f32.mrb[0].mxu0
  %1815 = vmatprep.mubr.bf16.mxu0 0
  %1816 = vmatmul.mubr.bf16.gmra.mrb[0].mxu0 %v1711
  %v1817 = vpop.f32.mrb[0].mxu0
  %v1818 = vadd.f32 0.0, %v1817
  %v1819 = vpop.f32.mrb[0].mxu0
  %v1820 = vpop.f32.mrb[0].mxu0
  %v1821 = vadd.f32 0.0, %v1820
  %v1822 = vpop.f32.mrb[0].mxu0
  %1823 = vdwg.mxu0
  %v1828 = vunpack.c.l.b16 %v58
  %v1829 = vunpack.c.l.b16 %v59
  %v1830 = vunpack.c.l.b16 %v60
  %v1831 = vunpack.c.l.b16 %v61
  %v1832 = vpack.c.b16 %v1829, %v1828
  %v1833 = vpack.c.b16 %v1831, %v1830
  %v1835 = vsel %vm1706, %v1832, 0
  %v1838 = vsel %vm1706, %v1833, 0
  %v1841 = vand.u32 %v977, %v1715
  %1843 = vmatprep.subr.bf16.mxu0 0
  %1844 = vmatpush1.bf16.msra.mxu0 %v972
  %1845 = vmatprep.subr.bf16.mxu0 0
  %1846 = vmatpush1.bf16.msra.mxu0 %v973
  %1847 = vmatprep.subr.bf16.mxu0 0
  %1848 = vmatpush1.bf16.msra.mxu0 %v974
  %1849 = vmatprep.subr.bf16.mxu0 0
  %1850 = vmatpush1.bf16.msra.mxu0 %v975
  %1851 = vmatprep.subr.bf16.mxu0 0
  %1852 = vmatpush1.bf16.msra.mxu0 %v976
  %1853 = vmatprep.subr.bf16.mxu0 0
  %1854 = vmatpush1.bf16.msra.mxu0 %v1841
  %1855 = vmatprep.subr.bf16.mxu0 0
  %1856 = vmatpush1.bf16.msra.mxu0 0
  %1857 = vmatprep.subr.bf16.mxu0 0
  %1858 = vmatpush1.bf16.msra.mxu0 0
  %1859 = vmatprep.subr.bf16.mxu0 0
  %1860 = vmatpush1.bf16.msra.mxu0 0
  %1861 = vmatprep.subr.bf16.mxu0 0
  %1862 = vmatpush1.bf16.msra.mxu0 0
  %1863 = vmatprep.subr.bf16.mxu0 0
  %1864 = vmatpush1.bf16.msra.mxu0 0
  %1865 = vmatprep.subr.bf16.mxu0 0
  %1866 = vmatpush1.bf16.msra.mxu0 0
  %1867 = vmatprep.subr.bf16.mxu0 0
  %1868 = vmatpush1.bf16.msra.mxu0 0
  %1869 = vmatprep.subr.bf16.mxu0 0
  %1870 = vmatpush1.bf16.msra.mxu0 0
  %1871 = vmatprep.subr.bf16.mxu0 0
  %1872 = vmatpush1.bf16.msra.mxu0 0
  %1873 = vmatprep.subr.bf16.mxu0 0
  %1874 = vmatpush1.bf16.msra.mxu0 0
  %1875 = vmatprep.mubr.bf16.mxu0 0
  %1876 = vmatmul.mubr.bf16.gmra.mrb[0].mxu0 %v1835
  %v1877 = vpop.f32.mrb[0].mxu0
  %v1878 = vadd.f32 %v1810, %v1877
  %v1879 = vpop.f32.mrb[0].mxu0
  %v1880 = vpop.f32.mrb[0].mxu0
  %v1881 = vadd.f32 %v1813, %v1880
  %v1882 = vpop.f32.mrb[0].mxu0
  %1883 = vmatprep.mubr.bf16.mxu0 0
  %1884 = vmatmul.mubr.bf16.gmra.mrb[0].mxu0 %v1838
  %v1885 = vpop.f32.mrb[0].mxu0
  %v1886 = vadd.f32 %v1818, %v1885
  %v1887 = vpop.f32.mrb[0].mxu0
  %v1888 = vpop.f32.mrb[0].mxu0
  %v1889 = vadd.f32 %v1821, %v1888
  %v1890 = vpop.f32.mrb[0].mxu0
  %1891 = vdwg.mxu0
  %v1892 = vadd.f32 %v1878, %v148
  %v1893 = vadd.f32 %v1881, %v153
  %v1894 = vadd.f32 %v1886, %v158
  %v1895 = vadd.f32 %v1889, %v163
  %v1896 = vmax.f32 %v1892, 0.0
  %v1897 = vmax.f32 %v1893, 0.0
  %v1898 = vmax.f32 %v1894, 0.0
  %v1899 = vmax.f32 %v1895, 0.0
  %v1901 = vand.u32 %v1695, %v1715
  %1903 = vmatprep.subr.bf16.mxu0 0
  %1904 = vmatpush1.bf16.msra.mxu0 %v1690
  %1905 = vmatprep.subr.bf16.mxu0 0
  %1906 = vmatpush1.bf16.msra.mxu0 %v1691
  %1907 = vmatprep.subr.bf16.mxu0 0
  %1908 = vmatpush1.bf16.msra.mxu0 %v1692
  %1909 = vmatprep.subr.bf16.mxu0 0
  %1910 = vmatpush1.bf16.msra.mxu0 %v1693
  %1911 = vmatprep.subr.bf16.mxu0 0
  %1912 = vmatpush1.bf16.msra.mxu0 %v1694
  %1913 = vmatprep.subr.bf16.mxu0 0
  %1914 = vmatpush1.bf16.msra.mxu0 %v1901
  %1915 = vmatprep.subr.bf16.mxu0 0
  %1916 = vmatpush1.bf16.msra.mxu0 0
  %1917 = vmatprep.subr.bf16.mxu0 0
  %1918 = vmatpush1.bf16.msra.mxu0 0
  %1919 = vmatprep.subr.bf16.mxu0 0
  %1920 = vmatpush1.bf16.msra.mxu0 0
  %1921 = vmatprep.subr.bf16.mxu0 0
  %1922 = vmatpush1.bf16.msra.mxu0 0
  %1923 = vmatprep.subr.bf16.mxu0 0
  %1924 = vmatpush1.bf16.msra.mxu0 0
  %1925 = vmatprep.subr.bf16.mxu0 0
  %1926 = vmatpush1.bf16.msra.mxu0 0
  %1927 = vmatprep.subr.bf16.mxu0 0
  %1928 = vmatpush1.bf16.msra.mxu0 0
  %1929 = vmatprep.subr.bf16.mxu0 0
  %1930 = vmatpush1.bf16.msra.mxu0 0
  %1931 = vmatprep.subr.bf16.mxu0 0
  %1932 = vmatpush1.bf16.msra.mxu0 0
  %1933 = vmatprep.subr.bf16.mxu0 0
  %1934 = vmatpush1.bf16.msra.mxu0 0
  %1935 = vmatprep.mubr.bf16.mxu0 0
  %1936 = vmatmul.mubr.bf16.gmra.mrb[0].mxu0 %v1835
  %v1937 = vpop.f32.mrb[0].mxu0
  %v1938 = vadd.f32 %v148, %v1937
  %v1939 = vpop.f32.mrb[0].mxu0
  %v1940 = vpop.f32.mrb[0].mxu0
  %v1941 = vadd.f32 %v153, %v1940
  %v1942 = vpop.f32.mrb[0].mxu0
  %1943 = vmatprep.mubr.bf16.mxu0 0
  %1944 = vmatmul.mubr.bf16.gmra.mrb[0].mxu0 %v1838
  %v1945 = vpop.f32.mrb[0].mxu0
  %v1946 = vadd.f32 %v158, %v1945
  %v1947 = vpop.f32.mrb[0].mxu0
  %v1948 = vpop.f32.mrb[0].mxu0
  %v1949 = vadd.f32 %v163, %v1948
  %v1950 = vpop.f32.mrb[0].mxu0
  %1951 = vdwg.mxu0
  %v1952 = vmax.f32 %v1938, 0.0
  %v1953 = vmax.f32 %v1941, 0.0
  %v1954 = vmax.f32 %v1946, 0.0
  %v1955 = vmax.f32 %v1949, 0.0
  %v1956 = vmax.f32 %v1768, %v1896
  %v1957 = vmax.f32 %v1769, %v1897
  %v1958 = vmax.f32 %v1770, %v1898
  %v1959 = vmax.f32 %v1771, %v1899
  %v1960 = vpack.c.bf16 %v1957, %v1956
  %v1961 = vpack.c.bf16 %v1959, %v1958
  %v1962 = vmax.f32 %v1896, %v1952
  %v1963 = vmax.f32 %v1897, %v1953
  %v1964 = vmax.f32 %v1898, %v1954
  %v1965 = vmax.f32 %v1899, %v1955
  %v1966 = vpack.c.bf16 %v1963, %v1962
  %v1967 = vpack.c.bf16 %v1965, %v1964
  %v1970 = vunpack.c.l.b16 %v70
  %v1971 = vunpack.c.l.b16 %v71
  %v1972 = vpack.c.b16 %v1971, %v1970
  %vm1973 = vcmask 220160
  %v1975 = vsel %vm1973, %v1972, 0
  %vm1977 = vcmask 1044480
  %vm1978 = vcmask 1045504
  %v1979 = vsel %vm1977, 4294967295, 65535
  %v1980 = vsel %vm1978, %v1979, 0
  %v1982 = vand.u32 %v1961, %v1980
  %1984 = vmatprep.subr.bf16.mxu0 0
  %1985 = vmatpush1.bf16.msra.mxu0 %v1960
  %1986 = vmatprep.subr.bf16.mxu0 0
  %1987 = vmatpush1.bf16.msra.mxu0 %v1982
  %1988 = vmatprep.subr.bf16.mxu0 0
  %1989 = vmatpush1.bf16.msra.mxu0 0
  %1990 = vmatprep.subr.bf16.mxu0 0
  %1991 = vmatpush1.bf16.msra.mxu0 0
  %1992 = vmatprep.subr.bf16.mxu0 0
  %1993 = vmatpush1.bf16.msra.mxu0 0
  %1994 = vmatprep.subr.bf16.mxu0 0
  %1995 = vmatpush1.bf16.msra.mxu0 0
  %1996 = vmatprep.subr.bf16.mxu0 0
  %1997 = vmatpush1.bf16.msra.mxu0 0
  %1998 = vmatprep.subr.bf16.mxu0 0
  %1999 = vmatpush1.bf16.msra.mxu0 0
  %2000 = vmatprep.subr.bf16.mxu0 0
  %2001 = vmatpush1.bf16.msra.mxu0 0
  %2002 = vmatprep.subr.bf16.mxu0 0
  %2003 = vmatpush1.bf16.msra.mxu0 0
  %2004 = vmatprep.subr.bf16.mxu0 0
  %2005 = vmatpush1.bf16.msra.mxu0 0
  %2006 = vmatprep.subr.bf16.mxu0 0
  %2007 = vmatpush1.bf16.msra.mxu0 0
  %2008 = vmatprep.subr.bf16.mxu0 0
  %2009 = vmatpush1.bf16.msra.mxu0 0
  %2010 = vmatprep.subr.bf16.mxu0 0
  %2011 = vmatpush1.bf16.msra.mxu0 0
  %2012 = vmatprep.subr.bf16.mxu0 0
  %2013 = vmatpush1.bf16.msra.mxu0 0
  %2014 = vmatprep.subr.bf16.mxu0 0
  %2015 = vmatpush1.bf16.msra.mxu0 0
  %2016 = vmatprep.mubr.bf16.mxu0 0
  %2017 = vmatmul.mubr.bf16.gmra.mrb[0].mxu0 %v1975
  %v2018 = vpop.f32.mrb[0].mxu0
  %v2019 = vadd.f32 %v170, %v2018
  %v2020 = vpop.f32.mrb[0].mxu0
  %v2021 = vpop.f32.mrb[0].mxu0
  %v2022 = vadd.f32 %v175, %v2021
  %v2023 = vpop.f32.mrb[0].mxu0
  %2024 = vdwg.mxu0
  %v2025 = vmax.f32 %v2019, 0.0
  %v2026 = vmax.f32 %v2022, 0.0
  %v2027 = vpack.c.bf16 %v2026, %v2025
  %v2030 = vunpack.c.l.b16 %v67
  %v2031 = vunpack.c.l.b16 %v68
  %v2032 = vpack.c.b16 %v2031, %v2030
  %v2034 = vsel %vm1973, %v2032, 0
  %v2037 = vand.u32 %v1967, %v1980
  %2039 = vmatprep.subr.bf16.mxu0 0
  %2040 = vmatpush1.bf16.msra.mxu0 %v1966
  %2041 = vmatprep.subr.bf16.mxu0 0
  %2042 = vmatpush1.bf16.msra.mxu0 %v2037
  %2043 = vmatprep.subr.bf16.mxu0 0
  %2044 = vmatpush1.bf16.msra.mxu0 0
  %2045 = vmatprep.subr.bf16.mxu0 0
  %2046 = vmatpush1.bf16.msra.mxu0 0
  %2047 = vmatprep.subr.bf16.mxu0 0
  %2048 = vmatpush1.bf16.msra.mxu0 0
  %2049 = vmatprep.subr.bf16.mxu0 0
  %2050 = vmatpush1.bf16.msra.mxu0 0
  %2051 = vmatprep.subr.bf16.mxu0 0
  %2052 = vmatpush1.bf16.msra.mxu0 0
  %2053 = vmatprep.subr.bf16.mxu0 0
  %2054 = vmatpush1.bf16.msra.mxu0 0
  %2055 = vmatprep.subr.bf16.mxu0 0
  %2056 = vmatpush1.bf16.msra.mxu0 0
  %2057 = vmatprep.subr.bf16.mxu0 0
  %2058 = vmatpush1.bf16.msra.mxu0 0
  %2059 = vmatprep.subr.bf16.mxu0 0
  %2060 = vmatpush1.bf16.msra.mxu0 0
  %2061 = vmatprep.subr.bf16.mxu0 0
  %2062 = vmatpush1.bf16.msra.mxu0 0
  %2063 = vmatprep.subr.bf16.mxu0 0
  %2064 = vmatpush1.bf16.msra.mxu0 0
  %2065 = vmatprep.subr.bf16.mxu0 0
  %2066 = vmatpush1.bf16.msra.mxu0 0
  %2067 = vmatprep.subr.bf16.mxu0 0
  %2068 = vmatpush1.bf16.msra.mxu0 0
  %2069 = vmatprep.subr.bf16.mxu0 0
  %2070 = vmatpush1.bf16.msra.mxu0 0
  %2071 = vmatprep.mubr.bf16.mxu0 0
  %2072 = vmatmul.mubr.bf16.gmra.mrb[0].mxu0 %v2034
  %v2073 = vpop.f32.mrb[0].mxu0
  %v2074 = vadd.f32 %v170, %v2073
  %v2075 = vpop.f32.mrb[0].mxu0
  %v2076 = vpop.f32.mrb[0].mxu0
  %v2077 = vadd.f32 %v175, %v2076
  %v2078 = vpop.f32.mrb[0].mxu0
  %2079 = vdwg.mxu0
  %v2080 = vmax.f32 %v2074, 0.0
  %v2081 = vmax.f32 %v2077, 0.0
  %v2082 = vpack.c.bf16 %v2081, %v2080
  %vm2083 = vcmask 72704
  %v2085 = vsel %vm2083, %v74, 0
  %vm2087 = vcmask 1043456
  %v2088 = vsel %vm2087, 4294967295, 65535
  %v2089 = vsel %vm1977, %v2088, 0
  %v2091 = vand.u32 %v2082, %v2089
  %2093 = vmatprep.subr.bf16.mxu0 0
  %2094 = vmatpush1.bf16.msra.mxu0 %v2091
  %2095 = vmatprep.subr.bf16.mxu0 0
  %2096 = vmatpush1.bf16.msra.mxu0 0
  %2097 = vmatprep.subr.bf16.mxu0 0
  %2098 = vmatpush1.bf16.msra.mxu0 0
  %2099 = vmatprep.subr.bf16.mxu0 0
  %2100 = vmatpush1.bf16.msra.mxu0 0
  %2101 = vmatprep.subr.bf16.mxu0 0
  %2102 = vmatpush1.bf16.msra.mxu0 0
  %2103 = vmatprep.subr.bf16.mxu0 0
  %2104 = vmatpush1.bf16.msra.mxu0 0
  %2105 = vmatprep.subr.bf16.mxu0 0
  %2106 = vmatpush1.bf16.msra.mxu0 0
  %2107 = vmatprep.subr.bf16.mxu0 0
  %2108 = vmatpush1.bf16.msra.mxu0 0
  %2109 = vmatprep.subr.bf16.mxu0 0
  %2110 = vmatpush1.bf16.msra.mxu0 0
  %2111 = vmatprep.subr.bf16.mxu0 0
  %2112 = vmatpush1.bf16.msra.mxu0 0
  %2113 = vmatprep.subr.bf16.mxu0 0
  %2114 = vmatpush1.bf16.msra.mxu0 0
  %2115 = vmatprep.subr.bf16.mxu0 0
  %2116 = vmatpush1.bf16.msra.mxu0 0
  %2117 = vmatprep.subr.bf16.mxu0 0
  %2118 = vmatpush1.bf16.msra.mxu0 0
  %2119 = vmatprep.subr.bf16.mxu0 0
  %2120 = vmatpush1.bf16.msra.mxu0 0
  %2121 = vmatprep.subr.bf16.mxu0 0
  %2122 = vmatpush1.bf16.msra.mxu0 0
  %2123 = vmatprep.subr.bf16.mxu0 0
  %2124 = vmatpush1.bf16.msra.mxu0 0
  %2125 = vmatprep.mubr.bf16.mxu0 0
  %2126 = vmatmul.mubr.bf16.gmra.mrb[0].mxu0 %v2085
  %v2127 = vpop.f32.mrb[0].mxu0
  %v2128 = vadd.f32 0.0, %v2127
  %v2129 = vpop.f32.mrb[0].mxu0
  %v2130 = vpop.f32.mrb[0].mxu0
  %v2131 = vpop.f32.mrb[0].mxu0
  %2132 = vdwg.mxu0
  %v2134 = vsel %vm2083, %v72, 0
  %v2137 = vand.u32 %v2027, %v2089
  %2139 = vmatprep.subr.bf16.mxu0 0
  %2140 = vmatpush1.bf16.msra.mxu0 %v2137
  %2141 = vmatprep.subr.bf16.mxu0 0
  %2142 = vmatpush1.bf16.msra.mxu0 0
  %2143 = vmatprep.subr.bf16.mxu0 0
  %2144 = vmatpush1.bf16.msra.mxu0 0
  %2145 = vmatprep.subr.bf16.mxu0 0
  %2146 = vmatpush1.bf16.msra.mxu0 0
  %2147 = vmatprep.subr.bf16.mxu0 0
  %2148 = vmatpush1.bf16.msra.mxu0 0
  %2149 = vmatprep.subr.bf16.mxu0 0
  %2150 = vmatpush1.bf16.msra.mxu0 0
  %2151 = vmatprep.subr.bf16.mxu0 0
  %2152 = vmatpush1.bf16.msra.mxu0 0
  %2153 = vmatprep.subr.bf16.mxu0 0
  %2154 = vmatpush1.bf16.msra.mxu0 0
  %2155 = vmatprep.subr.bf16.mxu0 0
  %2156 = vmatpush1.bf16.msra.mxu0 0
  %2157 = vmatprep.subr.bf16.mxu0 0
  %2158 = vmatpush1.bf16.msra.mxu0 0
  %2159 = vmatprep.subr.bf16.mxu0 0
  %2160 = vmatpush1.bf16.msra.mxu0 0
  %2161 = vmatprep.subr.bf16.mxu0 0
  %2162 = vmatpush1.bf16.msra.mxu0 0
  %2163 = vmatprep.subr.bf16.mxu0 0
  %2164 = vmatpush1.bf16.msra.mxu0 0
  %2165 = vmatprep.subr.bf16.mxu0 0
  %2166 = vmatpush1.bf16.msra.mxu0 0
  %2167 = vmatprep.subr.bf16.mxu0 0
  %2168 = vmatpush1.bf16.msra.mxu0 0
  %2169 = vmatprep.subr.bf16.mxu0 0
  %2170 = vmatpush1.bf16.msra.mxu0 0
  %2171 = vmatprep.mubr.bf16.mxu0 0
  %2172 = vmatmul.mubr.bf16.gmra.mrb[0].mxu0 %v2134
  %v2173 = vpop.f32.mrb[0].mxu0
  %v2174 = vadd.f32 %v2128, %v2173
  %v2175 = vpop.f32.mrb[0].mxu0
  %v2176 = vpop.f32.mrb[0].mxu0
  %v2177 = vpop.f32.mrb[0].mxu0
  %2178 = vdwg.mxu0
  %v2179 = vadd.f32 %v2174, %v181
  %v2180 = vxor.u32 %v2179, 2147483648
  %v2181 = vmul.f32 %v2180, 1.442695
  %v2182 = vpow.pop %v2181
  %v2183 = vadd.f32 %v2182, 1.0
  %v2184 = vrcp.pop %v2183
  %v2185 = vmul.f32 1.0, %v2184
  %2186 = vst [vmem:[%s10] sm:$0x7f] %v2185
  // Predicated region
  $region42: #{cnn1d_forward.1} parent=0 // pred_check
    _
  $region43: #{cnn1d_forward.1} parent=0 // pred_check_branch
    %2188 = sbr.rel (0) target = $region45
  $region44: #{cnn1d_forward.1} parent=0 // pred_region
    _
  $region45: #{cnn1d_forward.1} parent=0 // pred_fallthru
    _
  // Predicated region
  $region46: #{cnn1d_forward.1} parent=0 // pred_check
    _
  $region47: #{cnn1d_forward.1} parent=0 // pred_check_branch
    %2190 = sbr.rel (0) target = $region49
  $region48: #{cnn1d_forward.1} parent=0 // pred_region
    _
  $region49: #{cnn1d_forward.1} parent=0 // pred_fallthru
    _

</llo_original>
